<compile_context>
chip_gen: v5e
topology: v5e:2x2
jax: 0.10.0
libtpu: 0.0.40
codegen_flags: <defaults>
</compile_context>

<pallas_src>
import functools
import math

import jax
import jax.numpy as jnp
from jax.experimental import pallas as pl
from jax.experimental.pallas import tpu as pltpu


# Model configuration (small shapes: batch=2, seq=8, hidden d2=32).
D2 = 32          # embedding / model width (d2)
WORD_NUMS = 16   # vocabulary size (wn); embedding table has wn+1 rows
N_HEAD = 4
N_LAYER = 2
HEAD_DIM = D2 // N_HEAD


# ----------------------------------------------------------------------------
# Fused kernel: whole forward, all batch elements stacked on the sublane axis
# ----------------------------------------------------------------------------

def _transformer_block_kernel(onehot_ref, embed_ref, qkvfc_ref, inw_ref,
                              inb_ref, outw_ref, outb_ref, ff_ref, o_ref, *,
                              n_layer, n_head, head_dim, d, batch, t_pad,
                              t_valid):
    """Fully fused TransformerBlock forward (all batch elements at once).

    onehot_ref : [B*Tp, Wp]    one-hot token ids (CLS appended, rows padded)
    embed_ref  : [Wp, D]       embedding table with pfc residual folded in (bf16)
    qkvfc_ref  : [L, D, 3D]    merged q|k|v FC weights (ReLU applied in kernel)
    inw_ref    : [L, 3D, 3D]   block-diagonal MHA in_proj (q block pre-scaled)
    inb_ref    : [L, 1, 3D]    concatenated in_proj bias (q slice pre-scaled)
    outw_ref   : [L, D, D]     MHA out_proj weight (right-multiply layout)
    outb_ref   : [L, 1, D]     MHA out_proj bias
    ff_ref     : [2L, D, D]    fc1 / fc2 weights
    o_ref      : [B*Tp, D]     output
    """
    f32 = jnp.float32

    def mmw(a, w):  # activation @ weight on the MXU; bf16 inputs, f32 accumulate
        return jnp.dot(a.astype(w.dtype), w, preferred_element_type=f32)

    # Additive key-padding mask (columns >= t_valid are padding), hoisted out of
    # all loops. 2-D iota (TPU requirement).
    col = jax.lax.broadcasted_iota(jnp.int32, (t_pad, t_pad), 1)
    mask_bias = jnp.where(col < t_valid, 0.0, -1e30).astype(f32)

    # Embedding lookup (one-hot @ table) with the pfc residual already folded
    # into the table: x = e + e @ pfc == onehot @ (embed @ (I + pfc)).
    x = mmw(onehot_ref[...], embed_ref[...])                     # [N, D] f32

    for l in range(n_layer):
        # Merged FC q|k|v: relu(x @ [Wq^T | Wk^T | Wv^T])        -> [N, 3D]
        qkv_in = jnp.maximum(mmw(x, qkvfc_ref[l]), 0.0)
        # Merged MHA in_proj: one block-diagonal [3D,3D] matmul + bias.
        # 1/sqrt(head_dim) is folded into the q block and q bias.
        qkv = mmw(qkv_in, inw_ref[l]) + inb_ref[l]               # [N, 3D] f32

        # Per-(batch, head) softmax attention; heads/batches re-assembled along
        # lanes/sublanes so out_proj is ONE lane-dense [N,D]@[D,D] matmul.
        ctx_rows = []
        for b in range(batch):
            r0 = b * t_pad
            head_ctx = []
            for h in range(n_head):
                c = h * head_dim
                q = qkv[r0:r0 + t_pad, c:c + head_dim]           # [Tp, Dh]
                k = qkv[r0:r0 + t_pad, d + c:d + c + head_dim]
                v = qkv[r0:r0 + t_pad, 2 * d + c:2 * d + c + head_dim]
                s = jax.lax.dot_general(q, k, (((1,), (1,)), ((), ())),
                                        preferred_element_type=f32)
                s = s + mask_bias                                # mask padded keys
                s = s - jnp.max(s, axis=-1, keepdims=True)       # stable softmax
                p = jnp.exp(s)
                p = p * pl.reciprocal(jnp.sum(p, axis=-1, keepdims=True),
                                      approx=True)
                head_ctx.append(jnp.dot(p, v, preferred_element_type=f32))
            ctx_rows.append(jnp.concatenate(head_ctx, axis=-1))  # [Tp, D]
        ctx = jnp.concatenate(ctx_rows, axis=0)                  # [N, D]

        # x = out_proj(ctx) + x
        x = mmw(ctx, outw_ref[l]) + outb_ref[l] + x
        # x = fc2(fc1(x) + x) + x   with fc* = relu(Linear(bias=False))
        h1 = jnp.maximum(mmw(x, ff_ref[2 * l]), 0.0)
        x = jnp.maximum(mmw(h1 + x, ff_ref[2 * l + 1]), 0.0) + x

    o_ref[...] = x.astype(o_ref.dtype)


# ----------------------------------------------------------------------------
# Wrapper: CLS append + one-hot + padding (layout glue), single pallas_call
# ----------------------------------------------------------------------------

def transformer_block_forward(tokens, params):
    """tokens: [B, S] int32 token ids in [0, WORD_NUMS). Returns [B, S+1, D2]."""
    B, S = tokens.shape
    T = S + 1
    Tp = ((T + 7) // 8) * 8                 # pad seq so per-batch slices align
    D, L, H, Dh = D2, N_LAYER, N_HEAD, HEAD_DIM
    W1 = WORD_NUMS + 1
    W1P = params["embed"].shape[0]          # padded vocab rows
    N = B * Tp

    # Append CLS token (index = word_nums), one-hot, pad rows/lanes, flatten.
    idx = jnp.concatenate(
        [tokens.astype(jnp.int32), jnp.full((B, 1), WORD_NUMS, jnp.int32)], axis=1)
    onehot = (idx[..., None] == jnp.arange(W1, dtype=jnp.int32)).astype(jnp.float32)
    onehot = jnp.pad(onehot, ((0, 0), (0, Tp - T), (0, W1P - W1)))
    onehot = onehot.reshape(N, W1P)

    kernel = functools.partial(
        _transformer_block_kernel,
        n_layer=L, n_head=H, head_dim=Dh, d=D, batch=B, t_pad=Tp, t_valid=T)

    def full_spec(shape):  # full-array, VMEM-resident block
        zeros = (0,) * len(shape)
        return pl.BlockSpec(shape, lambda i, z=zeros: z)

    out_flat = pl.pallas_call(
        kernel,
        out_shape=jax.ShapeDtypeStruct((N, D), jnp.float32),
        grid=(1,),                          # single invocation: batch is stacked
        in_specs=[
            full_spec((N, W1P)),                     # one-hot ids
            full_spec(params["embed"].shape),        # pfc-folded embedding table
            full_spec(params["qkv_fc"].shape),       # merged FC q|k|v weights
            full_spec(params["in_w"].shape),         # block-diag in_proj weights
            full_spec(params["in_b"].shape),         # in_proj bias
            full_spec(params["out_w"].shape),        # out_proj weights
            full_spec(params["out_b"].shape),        # out_proj bias
            full_spec(params["ff"].shape),           # fc1 / fc2 weights
        ],
        out_specs=full_spec((N, D)),
        compiler_params=pltpu.CompilerParams(
            dimension_semantics=("arbitrary",)),
    )(onehot, params["embed"], params["qkv_fc"], params["in_w"],
      params["in_b"], params["out_w"], params["out_b"], params["ff"])

    return out_flat.reshape(B, Tp, D)[:, :T, :]


# ----------------------------------------------------------------------------
# Deterministic parameter construction (torch layouts, repacked for the kernel)
# ----------------------------------------------------------------------------

def init_params(key, d2=D2, wn=WORD_NUMS, n_head=N_HEAD, n_layer=N_LAYER):
    H, Dh, L = n_head, d2 // n_head, n_layer
    W1 = wn + 1
    W1P = ((W1 + 31) // 32) * 32            # lane-friendly padded vocab rows
    keys = jax.random.split(key, 2 + 9 * L)
    kit = iter(keys)
    s = 1.0 / math.sqrt(d2)
    bf16, f32 = jnp.bfloat16, jnp.float32

    def lin(k, out_dim, in_dim):  # torch nn.Linear weight layout [out, in]
        return jax.random.uniform(k, (out_dim, in_dim), f32, -s, s)

    # Embedding table + pfc Linear, folded: onehot @ embed @ (I + pfc^T)
    embed = 0.3 * jax.random.normal(next(kit), (W1, d2), f32)
    pfc_w = lin(next(kit), d2, d2)                       # torch [out, in]
    embed_eff = embed @ (jnp.eye(d2, dtype=f32) + pfc_w.T)
    embed_eff = jnp.pad(embed_eff, ((0, W1P - W1), (0, 0)))

    scale = 1.0 / math.sqrt(Dh)
    qkv_fc, in_w, in_b, out_w, out_b, ff = [], [], [], [], [], []
    for _ in range(L):
        # FC q/k/v (bias=False) -> merged [D, 3D] right-multiply weight
        wq, wk, wv = lin(next(kit), d2, d2), lin(next(kit), d2, d2), lin(next(kit), d2, d2)
        qkv_fc.append(jnp.concatenate([wq.T, wk.T, wv.T], axis=1))

        # MHA in_proj: block-diagonal [3D, 3D]; 1/sqrt(Dh) folded into q block.
        in_proj_w = lin(next(kit), 3 * d2, d2)           # [3D, D] torch layout
        in_proj_b = 0.02 * jax.random.normal(next(kit), (3 * d2,), f32)
        bd = jnp.zeros((3 * d2, 3 * d2), f32)
        bd = bd.at[0:d2, 0:d2].set(in_proj_w[0:d2].T * scale)
        bd = bd.at[d2:2 * d2, d2:2 * d2].set(in_proj_w[d2:2 * d2].T)
        bd = bd.at[2 * d2:, 2 * d2:].set(in_proj_w[2 * d2:].T)
        in_w.append(bd)
        in_b.append(jnp.concatenate(
            [in_proj_b[0:d2] * scale, in_proj_b[d2:2 * d2], in_proj_b[2 * d2:]]
        ).reshape(1, 3 * d2))

        # MHA out_proj (Linear with bias)
        out_w.append(lin(next(kit), d2, d2).T)           # [D, D] right-multiply
        out_b.append(0.02 * jax.random.normal(next(kit), (1, d2), f32))

        ff.append(lin(next(kit), d2, d2).T)              # fc1
        ff.append(lin(next(kit), d2, d2).T)              # fc2

    return {
        "embed": embed_eff.astype(bf16),       # [W1P, D]   (pfc folded in)
        "qkv_fc": jnp.stack(qkv_fc).astype(bf16),   # [L, D, 3D]
        "in_w": jnp.stack(in_w).astype(bf16),       # [L, 3D, 3D]
        "in_b": jnp.stack(in_b),                    # [L, 1, 3D]  f32
        "out_w": jnp.stack(out_w).astype(bf16),     # [L, D, D]
        "out_b": jnp.stack(out_b),                  # [L, 1, D]   f32
        "ff": jnp.stack(ff).astype(bf16),           # [2L, D, D]
    }


if __name__ == "__main__":
    key = jax.random.PRNGKey(0)
    k_in, k_par = jax.random.split(key)
    # [B, S] integer token ids, like the torch module's LongTensor input.
    tokens = jax.random.randint(k_in, (2, 8), 0, WORD_NUMS, dtype=jnp.int32)
    params = init_params(k_par)

    fwd = jax.jit(transformer_block_forward)
    out = jax.block_until_ready(fwd(tokens, params))
    assert out.shape == (2, 9, D2), out.shape
    assert bool(jnp.all(jnp.isfinite(out)))
    print("KERNEL_OK")
</pallas_src>

<mosaic_0001>
module attributes {stable_mosaic.version = 11 : i64} {
  func.func @_transformer_block_kernel(%arg0: i32, %arg1: memref<32x32xf32, #tpu.memory_space<vmem>>, %arg2: memref<32x32xbf16, #tpu.memory_space<vmem>>, %arg3: memref<2x32x96xbf16, #tpu.memory_space<vmem>>, %arg4: memref<2x96x96xbf16, #tpu.memory_space<vmem>>, %arg5: memref<2x1x96xf32, #tpu.memory_space<vmem>>, %arg6: memref<2x32x32xbf16, #tpu.memory_space<vmem>>, %arg7: memref<2x1x32xf32, #tpu.memory_space<vmem>>, %arg8: memref<4x32x32xbf16, #tpu.memory_space<vmem>>, %arg9: memref<32x32xf32, #tpu.memory_space<vmem>>) attributes {dimension_semantics = [#tpu.dimension_semantics<arbitrary>], iteration_bounds = array<i64: 1>, scalar_prefetch = 0 : i64, scratch_operands = 0 : i64, tpu.core_type = #tpu.core_type<tc>, window_params = [{pipeline_mode = #tpu.pipeline_mode<synchronous>, transform_indices = @transform_0, window_bounds = array<i64: 32, 32>}, {pipeline_mode = #tpu.pipeline_mode<synchronous>, transform_indices = @transform_1, window_bounds = array<i64: 32, 32>}, {pipeline_mode = #tpu.pipeline_mode<synchronous>, transform_indices = @transform_2, window_bounds = array<i64: 2, 32, 96>}, {pipeline_mode = #tpu.pipeline_mode<synchronous>, transform_indices = @transform_3, window_bounds = array<i64: 2, 96, 96>}, {pipeline_mode = #tpu.pipeline_mode<synchronous>, transform_indices = @transform_4, window_bounds = array<i64: 2, 1, 96>}, {pipeline_mode = #tpu.pipeline_mode<synchronous>, transform_indices = @transform_5, window_bounds = array<i64: 2, 32, 32>}, {pipeline_mode = #tpu.pipeline_mode<synchronous>, transform_indices = @transform_6, window_bounds = array<i64: 2, 1, 32>}, {pipeline_mode = #tpu.pipeline_mode<synchronous>, transform_indices = @transform_7, window_bounds = array<i64: 4, 32, 32>}, {pipeline_mode = #tpu.pipeline_mode<synchronous>, transform_indices = @transform_8, window_bounds = array<i64: 32, 32>}]} {
    %0 = tpu.iota {dimensions = array<i32: 1>} : vector<16x16xi32>
    %c9_i32 = arith.constant 9 : i32
    %1 = vector.broadcast %c9_i32 : i32 to vector<16x16xi32>
    %2 = arith.cmpi slt, %0, %1 : vector<16x16xi32>
    %cst = arith.constant 0.000000e+00 : f32
    %cst_0 = arith.constant -1.000000e+30 : f32
    %3 = vector.broadcast %cst : f32 to vector<16x16xf32>
    %4 = vector.broadcast %cst_0 : f32 to vector<16x16xf32>
    %5 = arith.select %2, %3, %4 : vector<16x16xi1>, vector<16x16xf32>
    %c0 = arith.constant 0 : index
    %c0_1 = arith.constant 0 : index
    %6 = vector.load %arg1[%c0, %c0_1] : memref<32x32xf32, #tpu.memory_space<vmem>>, vector<32x32xf32>
    %c0_2 = arith.constant 0 : index
    %c0_3 = arith.constant 0 : index
    %7 = vector.load %arg2[%c0_2, %c0_3] : memref<32x32xbf16, #tpu.memory_space<vmem>>, vector<32x32xbf16>
    %8 = arith.truncf %6 : vector<32x32xf32> to vector<32x32xbf16>
    %cst_4 = arith.constant dense<0.000000e+00> : vector<32x32xf32>
    %9 = tpu.matmul %8, %7, %cst_4 {dimension_numbers = #tpu.dot_dimension_numbers<[1], [0], [0], [1], [0, 0, 1, 1], [], []>} : vector<32x32xbf16>, vector<32x32xbf16>, vector<32x32xf32> -> vector<32x32xf32>
    %c0_5 = arith.constant 0 : index
    %c0_6 = arith.constant 0 : index
    %c0_7 = arith.constant 0 : index
    %10 = vector.load %arg3[%c0_5, %c0_6, %c0_7] : memref<2x32x96xbf16, #tpu.memory_space<vmem>>, vector<1x32x96xbf16>
    %11 = vector.shape_cast %10 : vector<1x32x96xbf16> to vector<32x96xbf16>
    %12 = arith.truncf %9 : vector<32x32xf32> to vector<32x32xbf16>
    %cst_8 = arith.constant dense<0.000000e+00> : vector<32x96xf32>
    %13 = tpu.matmul %12, %11, %cst_8 {dimension_numbers = #tpu.dot_dimension_numbers<[1], [0], [0], [1], [0, 0, 1, 1], [], []>} : vector<32x32xbf16>, vector<32x96xbf16>, vector<32x96xf32> -> vector<32x96xf32>
    %cst_9 = arith.constant 0.000000e+00 : f32
    %14 = vector.broadcast %cst_9 : f32 to vector<32x96xf32>
    %15 = arith.maximumf %13, %14 : vector<32x96xf32>
    %c0_10 = arith.constant 0 : index
    %c0_11 = arith.constant 0 : index
    %c0_12 = arith.constant 0 : index
    %16 = vector.load %arg4[%c0_10, %c0_11, %c0_12] : memref<2x96x96xbf16, #tpu.memory_space<vmem>>, vector<1x96x96xbf16>
    %17 = vector.shape_cast %16 : vector<1x96x96xbf16> to vector<96x96xbf16>
    %18 = arith.truncf %15 : vector<32x96xf32> to vector<32x96xbf16>
    %cst_13 = arith.constant dense<0.000000e+00> : vector<32x96xf32>
    %19 = tpu.matmul %18, %17, %cst_13 {dimension_numbers = #tpu.dot_dimension_numbers<[1], [0], [0], [1], [0, 0, 1, 1], [], []>} : vector<32x96xbf16>, vector<96x96xbf16>, vector<32x96xf32> -> vector<32x96xf32>
    %c0_14 = arith.constant 0 : index
    %c0_15 = arith.constant 0 : index
    %c0_16 = arith.constant 0 : index
    %20 = vector.load %arg5[%c0_14, %c0_15, %c0_16] : memref<2x1x96xf32, #tpu.memory_space<vmem>>, vector<1x1x96xf32>
    %21 = vector.shape_cast %20 : vector<1x1x96xf32> to vector<1x96xf32>
    %22 = vector.broadcast %21 : vector<1x96xf32> to vector<32x96xf32>
    %23 = arith.addf %19, %22 : vector<32x96xf32>
    %24 = vector.extract_strided_slice %23 {offsets = [0, 0], sizes = [16, 8], strides = [1, 1]} : vector<32x96xf32> to vector<16x8xf32>
    %25 = vector.extract_strided_slice %23 {offsets = [0, 32], sizes = [16, 8], strides = [1, 1]} : vector<32x96xf32> to vector<16x8xf32>
    %26 = vector.extract_strided_slice %23 {offsets = [0, 64], sizes = [16, 8], strides = [1, 1]} : vector<32x96xf32> to vector<16x8xf32>
    %cst_17 = arith.constant dense<0.000000e+00> : vector<16x16xf32>
    %27 = tpu.matmul %24, %25, %cst_17 {dimension_numbers = #tpu.dot_dimension_numbers<[1], [1], [0], [0], [0, 0, 1, 0], [], []>} : vector<16x8xf32>, vector<16x8xf32>, vector<16x16xf32> -> vector<16x16xf32>
    %28 = arith.addf %27, %5 : vector<16x16xf32>
    %cst_18 = arith.constant dense<0xFF800000> : vector<16xf32>
    %29 = vector.multi_reduction <maximumf>, %28, %cst_18 [1] : vector<16x16xf32> to vector<16xf32>
    %30 = vector.shape_cast %29 : vector<16xf32> to vector<16x1xf32>
    %31 = vector.broadcast %30 : vector<16x1xf32> to vector<16x16xf32>
    %32 = arith.subf %28, %31 : vector<16x16xf32>
    %33 = math.exp %32 : vector<16x16xf32>
    %cst_19 = arith.constant dense<0.000000e+00> : vector<16xf32>
    %34 = vector.multi_reduction <add>, %33, %cst_19 [1] : vector<16x16xf32> to vector<16xf32>
    %35 = vector.shape_cast %34 : vector<16xf32> to vector<16x1xf32>
    %36 = tpu.reciprocal %35 {approx = true} : vector<16x1xf32> -> vector<16x1xf32>
    %37 = vector.broadcast %36 : vector<16x1xf32> to vector<16x16xf32>
    %38 = arith.mulf %33, %37 : vector<16x16xf32>
    %cst_20 = arith.constant dense<0.000000e+00> : vector<16x8xf32>
    %39 = tpu.matmul %38, %26, %cst_20 {dimension_numbers = #tpu.dot_dimension_numbers<[1], [0], [0], [1], [0, 0, 1, 1], [], []>} : vector<16x16xf32>, vector<16x8xf32>, vector<16x8xf32> -> vector<16x8xf32>
    %40 = vector.extract_strided_slice %23 {offsets = [0, 8], sizes = [16, 8], strides = [1, 1]} : vector<32x96xf32> to vector<16x8xf32>
    %41 = vector.extract_strided_slice %23 {offsets = [0, 40], sizes = [16, 8], strides = [1, 1]} : vector<32x96xf32> to vector<16x8xf32>
    %42 = vector.extract_strided_slice %23 {offsets = [0, 72], sizes = [16, 8], strides = [1, 1]} : vector<32x96xf32> to vector<16x8xf32>
    %cst_21 = arith.constant dense<0.000000e+00> : vector<16x16xf32>
    %43 = tpu.matmul %40, %41, %cst_21 {dimension_numbers = #tpu.dot_dimension_numbers<[1], [1], [0], [0], [0, 0, 1, 0], [], []>} : vector<16x8xf32>, vector<16x8xf32>, vector<16x16xf32> -> vector<16x16xf32>
    %44 = arith.addf %43, %5 : vector<16x16xf32>
    %cst_22 = arith.constant dense<0xFF800000> : vector<16xf32>
    %45 = vector.multi_reduction <maximumf>, %44, %cst_22 [1] : vector<16x16xf32> to vector<16xf32>
    %46 = vector.shape_cast %45 : vector<16xf32> to vector<16x1xf32>
    %47 = vector.broadcast %46 : vector<16x1xf32> to vector<16x16xf32>
    %48 = arith.subf %44, %47 : vector<16x16xf32>
    %49 = math.exp %48 : vector<16x16xf32>
    %cst_23 = arith.constant dense<0.000000e+00> : vector<16xf32>
    %50 = vector.multi_reduction <add>, %49, %cst_23 [1] : vector<16x16xf32> to vector<16xf32>
    %51 = vector.shape_cast %50 : vector<16xf32> to vector<16x1xf32>
    %52 = tpu.reciprocal %51 {approx = true} : vector<16x1xf32> -> vector<16x1xf32>
    %53 = vector.broadcast %52 : vector<16x1xf32> to vector<16x16xf32>
    %54 = arith.mulf %49, %53 : vector<16x16xf32>
    %cst_24 = arith.constant dense<0.000000e+00> : vector<16x8xf32>
    %55 = tpu.matmul %54, %42, %cst_24 {dimension_numbers = #tpu.dot_dimension_numbers<[1], [0], [0], [1], [0, 0, 1, 1], [], []>} : vector<16x16xf32>, vector<16x8xf32>, vector<16x8xf32> -> vector<16x8xf32>
    %56 = vector.extract_strided_slice %23 {offsets = [0, 16], sizes = [16, 8], strides = [1, 1]} : vector<32x96xf32> to vector<16x8xf32>
    %57 = vector.extract_strided_slice %23 {offsets = [0, 48], sizes = [16, 8], strides = [1, 1]} : vector<32x96xf32> to vector<16x8xf32>
    %58 = vector.extract_strided_slice %23 {offsets = [0, 80], sizes = [16, 8], strides = [1, 1]} : vector<32x96xf32> to vector<16x8xf32>
    %cst_25 = arith.constant dense<0.000000e+00> : vector<16x16xf32>
    %59 = tpu.matmul %56, %57, %cst_25 {dimension_numbers = #tpu.dot_dimension_numbers<[1], [1], [0], [0], [0, 0, 1, 0], [], []>} : vector<16x8xf32>, vector<16x8xf32>, vector<16x16xf32> -> vector<16x16xf32>
    %60 = arith.addf %59, %5 : vector<16x16xf32>
    %cst_26 = arith.constant dense<0xFF800000> : vector<16xf32>
    %61 = vector.multi_reduction <maximumf>, %60, %cst_26 [1] : vector<16x16xf32> to vector<16xf32>
    %62 = vector.shape_cast %61 : vector<16xf32> to vector<16x1xf32>
    %63 = vector.broadcast %62 : vector<16x1xf32> to vector<16x16xf32>
    %64 = arith.subf %60, %63 : vector<16x16xf32>
    %65 = math.exp %64 : vector<16x16xf32>
    %cst_27 = arith.constant dense<0.000000e+00> : vector<16xf32>
    %66 = vector.multi_reduction <add>, %65, %cst_27 [1] : vector<16x16xf32> to vector<16xf32>
    %67 = vector.shape_cast %66 : vector<16xf32> to vector<16x1xf32>
    %68 = tpu.reciprocal %67 {approx = true} : vector<16x1xf32> -> vector<16x1xf32>
    %69 = vector.broadcast %68 : vector<16x1xf32> to vector<16x16xf32>
    %70 = arith.mulf %65, %69 : vector<16x16xf32>
    %cst_28 = arith.constant dense<0.000000e+00> : vector<16x8xf32>
    %71 = tpu.matmul %70, %58, %cst_28 {dimension_numbers = #tpu.dot_dimension_numbers<[1], [0], [0], [1], [0, 0, 1, 1], [], []>} : vector<16x16xf32>, vector<16x8xf32>, vector<16x8xf32> -> vector<16x8xf32>
    %72 = vector.extract_strided_slice %23 {offsets = [0, 24], sizes = [16, 8], strides = [1, 1]} : vector<32x96xf32> to vector<16x8xf32>
    %73 = vector.extract_strided_slice %23 {offsets = [0, 56], sizes = [16, 8], strides = [1, 1]} : vector<32x96xf32> to vector<16x8xf32>
    %74 = vector.extract_strided_slice %23 {offsets = [0, 88], sizes = [16, 8], strides = [1, 1]} : vector<32x96xf32> to vector<16x8xf32>
    %cst_29 = arith.constant dense<0.000000e+00> : vector<16x16xf32>
    %75 = tpu.matmul %72, %73, %cst_29 {dimension_numbers = #tpu.dot_dimension_numbers<[1], [1], [0], [0], [0, 0, 1, 0], [], []>} : vector<16x8xf32>, vector<16x8xf32>, vector<16x16xf32> -> vector<16x16xf32>
    %76 = arith.addf %75, %5 : vector<16x16xf32>
    %cst_30 = arith.constant dense<0xFF800000> : vector<16xf32>
    %77 = vector.multi_reduction <maximumf>, %76, %cst_30 [1] : vector<16x16xf32> to vector<16xf32>
    %78 = vector.shape_cast %77 : vector<16xf32> to vector<16x1xf32>
    %79 = vector.broadcast %78 : vector<16x1xf32> to vector<16x16xf32>
    %80 = arith.subf %76, %79 : vector<16x16xf32>
    %81 = math.exp %80 : vector<16x16xf32>
    %cst_31 = arith.constant dense<0.000000e+00> : vector<16xf32>
    %82 = vector.multi_reduction <add>, %81, %cst_31 [1] : vector<16x16xf32> to vector<16xf32>
    %83 = vector.shape_cast %82 : vector<16xf32> to vector<16x1xf32>
    %84 = tpu.reciprocal %83 {approx = true} : vector<16x1xf32> -> vector<16x1xf32>
    %85 = vector.broadcast %84 : vector<16x1xf32> to vector<16x16xf32>
    %86 = arith.mulf %81, %85 : vector<16x16xf32>
    %cst_32 = arith.constant dense<0.000000e+00> : vector<16x8xf32>
    %87 = tpu.matmul %86, %74, %cst_32 {dimension_numbers = #tpu.dot_dimension_numbers<[1], [0], [0], [1], [0, 0, 1, 1], [], []>} : vector<16x16xf32>, vector<16x8xf32>, vector<16x8xf32> -> vector<16x8xf32>
    %88 = tpu.concatenate %39, %55, %71, %87 in 1 : vector<16x8xf32>, vector<16x8xf32>, vector<16x8xf32>, vector<16x8xf32> -> vector<16x32xf32>
    %89 = vector.extract_strided_slice %23 {offsets = [16, 0], sizes = [16, 8], strides = [1, 1]} : vector<32x96xf32> to vector<16x8xf32>
    %90 = vector.extract_strided_slice %23 {offsets = [16, 32], sizes = [16, 8], strides = [1, 1]} : vector<32x96xf32> to vector<16x8xf32>
    %91 = vector.extract_strided_slice %23 {offsets = [16, 64], sizes = [16, 8], strides = [1, 1]} : vector<32x96xf32> to vector<16x8xf32>
    %cst_33 = arith.constant dense<0.000000e+00> : vector<16x16xf32>
    %92 = tpu.matmul %89, %90, %cst_33 {dimension_numbers = #tpu.dot_dimension_numbers<[1], [1], [0], [0], [0, 0, 1, 0], [], []>} : vector<16x8xf32>, vector<16x8xf32>, vector<16x16xf32> -> vector<16x16xf32>
    %93 = arith.addf %92, %5 : vector<16x16xf32>
    %cst_34 = arith.constant dense<0xFF800000> : vector<16xf32>
    %94 = vector.multi_reduction <maximumf>, %93, %cst_34 [1] : vector<16x16xf32> to vector<16xf32>
    %95 = vector.shape_cast %94 : vector<16xf32> to vector<16x1xf32>
    %96 = vector.broadcast %95 : vector<16x1xf32> to vector<16x16xf32>
    %97 = arith.subf %93, %96 : vector<16x16xf32>
    %98 = math.exp %97 : vector<16x16xf32>
    %cst_35 = arith.constant dense<0.000000e+00> : vector<16xf32>
    %99 = vector.multi_reduction <add>, %98, %cst_35 [1] : vector<16x16xf32> to vector<16xf32>
    %100 = vector.shape_cast %99 : vector<16xf32> to vector<16x1xf32>
    %101 = tpu.reciprocal %100 {approx = true} : vector<16x1xf32> -> vector<16x1xf32>
    %102 = vector.broadcast %101 : vector<16x1xf32> to vector<16x16xf32>
    %103 = arith.mulf %98, %102 : vector<16x16xf32>
    %cst_36 = arith.constant dense<0.000000e+00> : vector<16x8xf32>
    %104 = tpu.matmul %103, %91, %cst_36 {dimension_numbers = #tpu.dot_dimension_numbers<[1], [0], [0], [1], [0, 0, 1, 1], [], []>} : vector<16x16xf32>, vector<16x8xf32>, vector<16x8xf32> -> vector<16x8xf32>
    %105 = vector.extract_strided_slice %23 {offsets = [16, 8], sizes = [16, 8], strides = [1, 1]} : vector<32x96xf32> to vector<16x8xf32>
    %106 = vector.extract_strided_slice %23 {offsets = [16, 40], sizes = [16, 8], strides = [1, 1]} : vector<32x96xf32> to vector<16x8xf32>
    %107 = vector.extract_strided_slice %23 {offsets = [16, 72], sizes = [16, 8], strides = [1, 1]} : vector<32x96xf32> to vector<16x8xf32>
    %cst_37 = arith.constant dense<0.000000e+00> : vector<16x16xf32>
    %108 = tpu.matmul %105, %106, %cst_37 {dimension_numbers = #tpu.dot_dimension_numbers<[1], [1], [0], [0], [0, 0, 1, 0], [], []>} : vector<16x8xf32>, vector<16x8xf32>, vector<16x16xf32> -> vector<16x16xf32>
    %109 = arith.addf %108, %5 : vector<16x16xf32>
    %cst_38 = arith.constant dense<0xFF800000> : vector<16xf32>
    %110 = vector.multi_reduction <maximumf>, %109, %cst_38 [1] : vector<16x16xf32> to vector<16xf32>
    %111 = vector.shape_cast %110 : vector<16xf32> to vector<16x1xf32>
    %112 = vector.broadcast %111 : vector<16x1xf32> to vector<16x16xf32>
    %113 = arith.subf %109, %112 : vector<16x16xf32>
    %114 = math.exp %113 : vector<16x16xf32>
    %cst_39 = arith.constant dense<0.000000e+00> : vector<16xf32>
    %115 = vector.multi_reduction <add>, %114, %cst_39 [1] : vector<16x16xf32> to vector<16xf32>
    %116 = vector.shape_cast %115 : vector<16xf32> to vector<16x1xf32>
    %117 = tpu.reciprocal %116 {approx = true} : vector<16x1xf32> -> vector<16x1xf32>
    %118 = vector.broadcast %117 : vector<16x1xf32> to vector<16x16xf32>
    %119 = arith.mulf %114, %118 : vector<16x16xf32>
    %cst_40 = arith.constant dense<0.000000e+00> : vector<16x8xf32>
    %120 = tpu.matmul %119, %107, %cst_40 {dimension_numbers = #tpu.dot_dimension_numbers<[1], [0], [0], [1], [0, 0, 1, 1], [], []>} : vector<16x16xf32>, vector<16x8xf32>, vector<16x8xf32> -> vector<16x8xf32>
    %121 = vector.extract_strided_slice %23 {offsets = [16, 16], sizes = [16, 8], strides = [1, 1]} : vector<32x96xf32> to vector<16x8xf32>
    %122 = vector.extract_strided_slice %23 {offsets = [16, 48], sizes = [16, 8], strides = [1, 1]} : vector<32x96xf32> to vector<16x8xf32>
    %123 = vector.extract_strided_slice %23 {offsets = [16, 80], sizes = [16, 8], strides = [1, 1]} : vector<32x96xf32> to vector<16x8xf32>
    %cst_41 = arith.constant dense<0.000000e+00> : vector<16x16xf32>
    %124 = tpu.matmul %121, %122, %cst_41 {dimension_numbers = #tpu.dot_dimension_numbers<[1], [1], [0], [0], [0, 0, 1, 0], [], []>} : vector<16x8xf32>, vector<16x8xf32>, vector<16x16xf32> -> vector<16x16xf32>
    %125 = arith.addf %124, %5 : vector<16x16xf32>
    %cst_42 = arith.constant dense<0xFF800000> : vector<16xf32>
    %126 = vector.multi_reduction <maximumf>, %125, %cst_42 [1] : vector<16x16xf32> to vector<16xf32>
    %127 = vector.shape_cast %126 : vector<16xf32> to vector<16x1xf32>
    %128 = vector.broadcast %127 : vector<16x1xf32> to vector<16x16xf32>
    %129 = arith.subf %125, %128 : vector<16x16xf32>
    %130 = math.exp %129 : vector<16x16xf32>
    %cst_43 = arith.constant dense<0.000000e+00> : vector<16xf32>
    %131 = vector.multi_reduction <add>, %130, %cst_43 [1] : vector<16x16xf32> to vector<16xf32>
    %132 = vector.shape_cast %131 : vector<16xf32> to vector<16x1xf32>
    %133 = tpu.reciprocal %132 {approx = true} : vector<16x1xf32> -> vector<16x1xf32>
    %134 = vector.broadcast %133 : vector<16x1xf32> to vector<16x16xf32>
    %135 = arith.mulf %130, %134 : vector<16x16xf32>
    %cst_44 = arith.constant dense<0.000000e+00> : vector<16x8xf32>
    %136 = tpu.matmul %135, %123, %cst_44 {dimension_numbers = #tpu.dot_dimension_numbers<[1], [0], [0], [1], [0, 0, 1, 1], [], []>} : vector<16x16xf32>, vector<16x8xf32>, vector<16x8xf32> -> vector<16x8xf32>
    %137 = vector.extract_strided_slice %23 {offsets = [16, 24], sizes = [16, 8], strides = [1, 1]} : vector<32x96xf32> to vector<16x8xf32>
    %138 = vector.extract_strided_slice %23 {offsets = [16, 56], sizes = [16, 8], strides = [1, 1]} : vector<32x96xf32> to vector<16x8xf32>
    %139 = vector.extract_strided_slice %23 {offsets = [16, 88], sizes = [16, 8], strides = [1, 1]} : vector<32x96xf32> to vector<16x8xf32>
    %cst_45 = arith.constant dense<0.000000e+00> : vector<16x16xf32>
    %140 = tpu.matmul %137, %138, %cst_45 {dimension_numbers = #tpu.dot_dimension_numbers<[1], [1], [0], [0], [0, 0, 1, 0], [], []>} : vector<16x8xf32>, vector<16x8xf32>, vector<16x16xf32> -> vector<16x16xf32>
    %141 = arith.addf %140, %5 : vector<16x16xf32>
    %cst_46 = arith.constant dense<0xFF800000> : vector<16xf32>
    %142 = vector.multi_reduction <maximumf>, %141, %cst_46 [1] : vector<16x16xf32> to vector<16xf32>
    %143 = vector.shape_cast %142 : vector<16xf32> to vector<16x1xf32>
    %144 = vector.broadcast %143 : vector<16x1xf32> to vector<16x16xf32>
    %145 = arith.subf %141, %144 : vector<16x16xf32>
    %146 = math.exp %145 : vector<16x16xf32>
    %cst_47 = arith.constant dense<0.000000e+00> : vector<16xf32>
    %147 = vector.multi_reduction <add>, %146, %cst_47 [1] : vector<16x16xf32> to vector<16xf32>
    %148 = vector.shape_cast %147 : vector<16xf32> to vector<16x1xf32>
    %149 = tpu.reciprocal %148 {approx = true} : vector<16x1xf32> -> vector<16x1xf32>
    %150 = vector.broadcast %149 : vector<16x1xf32> to vector<16x16xf32>
    %151 = arith.mulf %146, %150 : vector<16x16xf32>
    %cst_48 = arith.constant dense<0.000000e+00> : vector<16x8xf32>
    %152 = tpu.matmul %151, %139, %cst_48 {dimension_numbers = #tpu.dot_dimension_numbers<[1], [0], [0], [1], [0, 0, 1, 1], [], []>} : vector<16x16xf32>, vector<16x8xf32>, vector<16x8xf32> -> vector<16x8xf32>
    %153 = tpu.concatenate %104, %120, %136, %152 in 1 : vector<16x8xf32>, vector<16x8xf32>, vector<16x8xf32>, vector<16x8xf32> -> vector<16x32xf32>
    %154 = tpu.concatenate %88, %153 in 0 : vector<16x32xf32>, vector<16x32xf32> -> vector<32x32xf32>
    %c0_49 = arith.constant 0 : index
    %c0_50 = arith.constant 0 : index
    %c0_51 = arith.constant 0 : index
    %155 = vector.load %arg6[%c0_49, %c0_50, %c0_51] : memref<2x32x32xbf16, #tpu.memory_space<vmem>>, vector<1x32x32xbf16>
    %156 = vector.shape_cast %155 : vector<1x32x32xbf16> to vector<32x32xbf16>
    %157 = arith.truncf %154 : vector<32x32xf32> to vector<32x32xbf16>
    %cst_52 = arith.constant dense<0.000000e+00> : vector<32x32xf32>
    %158 = tpu.matmul %157, %156, %cst_52 {dimension_numbers = #tpu.dot_dimension_numbers<[1], [0], [0], [1], [0, 0, 1, 1], [], []>} : vector<32x32xbf16>, vector<32x32xbf16>, vector<32x32xf32> -> vector<32x32xf32>
    %c0_53 = arith.constant 0 : index
    %c0_54 = arith.constant 0 : index
    %c0_55 = arith.constant 0 : index
    %159 = vector.load %arg7[%c0_53, %c0_54, %c0_55] : memref<2x1x32xf32, #tpu.memory_space<vmem>>, vector<1x1x32xf32>
    %160 = vector.shape_cast %159 : vector<1x1x32xf32> to vector<1x32xf32>
    %161 = vector.broadcast %160 : vector<1x32xf32> to vector<32x32xf32>
    %162 = arith.addf %158, %161 : vector<32x32xf32>
    %163 = arith.addf %162, %9 : vector<32x32xf32>
    %c0_56 = arith.constant 0 : index
    %c0_57 = arith.constant 0 : index
    %c0_58 = arith.constant 0 : index
    %164 = vector.load %arg8[%c0_56, %c0_57, %c0_58] : memref<4x32x32xbf16, #tpu.memory_space<vmem>>, vector<1x32x32xbf16>
    %165 = vector.shape_cast %164 : vector<1x32x32xbf16> to vector<32x32xbf16>
    %166 = arith.truncf %163 : vector<32x32xf32> to vector<32x32xbf16>
    %cst_59 = arith.constant dense<0.000000e+00> : vector<32x32xf32>
    %167 = tpu.matmul %166, %165, %cst_59 {dimension_numbers = #tpu.dot_dimension_numbers<[1], [0], [0], [1], [0, 0, 1, 1], [], []>} : vector<32x32xbf16>, vector<32x32xbf16>, vector<32x32xf32> -> vector<32x32xf32>
    %cst_60 = arith.constant 0.000000e+00 : f32
    %168 = vector.broadcast %cst_60 : f32 to vector<32x32xf32>
    %169 = arith.maximumf %167, %168 : vector<32x32xf32>
    %170 = arith.addf %169, %163 : vector<32x32xf32>
    %c1 = arith.constant 1 : index
    %c0_61 = arith.constant 0 : index
    %c0_62 = arith.constant 0 : index
    %171 = vector.load %arg8[%c1, %c0_61, %c0_62] : memref<4x32x32xbf16, #tpu.memory_space<vmem>>, vector<1x32x32xbf16>
    %172 = vector.shape_cast %171 : vector<1x32x32xbf16> to vector<32x32xbf16>
    %173 = arith.truncf %170 : vector<32x32xf32> to vector<32x32xbf16>
    %cst_63 = arith.constant dense<0.000000e+00> : vector<32x32xf32>
    %174 = tpu.matmul %173, %172, %cst_63 {dimension_numbers = #tpu.dot_dimension_numbers<[1], [0], [0], [1], [0, 0, 1, 1], [], []>} : vector<32x32xbf16>, vector<32x32xbf16>, vector<32x32xf32> -> vector<32x32xf32>
    %cst_64 = arith.constant 0.000000e+00 : f32
    %175 = vector.broadcast %cst_64 : f32 to vector<32x32xf32>
    %176 = arith.maximumf %174, %175 : vector<32x32xf32>
    %177 = arith.addf %176, %163 : vector<32x32xf32>
    %c1_65 = arith.constant 1 : index
    %c0_66 = arith.constant 0 : index
    %c0_67 = arith.constant 0 : index
    %178 = vector.load %arg3[%c1_65, %c0_66, %c0_67] : memref<2x32x96xbf16, #tpu.memory_space<vmem>>, vector<1x32x96xbf16>
    %179 = vector.shape_cast %178 : vector<1x32x96xbf16> to vector<32x96xbf16>
    %180 = arith.truncf %177 : vector<32x32xf32> to vector<32x32xbf16>
    %cst_68 = arith.constant dense<0.000000e+00> : vector<32x96xf32>
    %181 = tpu.matmul %180, %179, %cst_68 {dimension_numbers = #tpu.dot_dimension_numbers<[1], [0], [0], [1], [0, 0, 1, 1], [], []>} : vector<32x32xbf16>, vector<32x96xbf16>, vector<32x96xf32> -> vector<32x96xf32>
    %cst_69 = arith.constant 0.000000e+00 : f32
    %182 = vector.broadcast %cst_69 : f32 to vector<32x96xf32>
    %183 = arith.maximumf %181, %182 : vector<32x96xf32>
    %c1_70 = arith.constant 1 : index
    %c0_71 = arith.constant 0 : index
    %c0_72 = arith.constant 0 : index
    %184 = vector.load %arg4[%c1_70, %c0_71, %c0_72] : memref<2x96x96xbf16, #tpu.memory_space<vmem>>, vector<1x96x96xbf16>
    %185 = vector.shape_cast %184 : vector<1x96x96xbf16> to vector<96x96xbf16>
    %186 = arith.truncf %183 : vector<32x96xf32> to vector<32x96xbf16>
    %cst_73 = arith.constant dense<0.000000e+00> : vector<32x96xf32>
    %187 = tpu.matmul %186, %185, %cst_73 {dimension_numbers = #tpu.dot_dimension_numbers<[1], [0], [0], [1], [0, 0, 1, 1], [], []>} : vector<32x96xbf16>, vector<96x96xbf16>, vector<32x96xf32> -> vector<32x96xf32>
    %c1_74 = arith.constant 1 : index
    %c0_75 = arith.constant 0 : index
    %c0_76 = arith.constant 0 : index
    %188 = vector.load %arg5[%c1_74, %c0_75, %c0_76] : memref<2x1x96xf32, #tpu.memory_space<vmem>>, vector<1x1x96xf32>
    %189 = vector.shape_cast %188 : vector<1x1x96xf32> to vector<1x96xf32>
    %190 = vector.broadcast %189 : vector<1x96xf32> to vector<32x96xf32>
    %191 = arith.addf %187, %190 : vector<32x96xf32>
    %192 = vector.extract_strided_slice %191 {offsets = [0, 0], sizes = [16, 8], strides = [1, 1]} : vector<32x96xf32> to vector<16x8xf32>
    %193 = vector.extract_strided_slice %191 {offsets = [0, 32], sizes = [16, 8], strides = [1, 1]} : vector<32x96xf32> to vector<16x8xf32>
    %194 = vector.extract_strided_slice %191 {offsets = [0, 64], sizes = [16, 8], strides = [1, 1]} : vector<32x96xf32> to vector<16x8xf32>
    %cst_77 = arith.constant dense<0.000000e+00> : vector<16x16xf32>
    %195 = tpu.matmul %192, %193, %cst_77 {dimension_numbers = #tpu.dot_dimension_numbers<[1], [1], [0], [0], [0, 0, 1, 0], [], []>} : vector<16x8xf32>, vector<16x8xf32>, vector<16x16xf32> -> vector<16x16xf32>
    %196 = arith.addf %195, %5 : vector<16x16xf32>
    %cst_78 = arith.constant dense<0xFF800000> : vector<16xf32>
    %197 = vector.multi_reduction <maximumf>, %196, %cst_78 [1] : vector<16x16xf32> to vector<16xf32>
    %198 = vector.shape_cast %197 : vector<16xf32> to vector<16x1xf32>
    %199 = vector.broadcast %198 : vector<16x1xf32> to vector<16x16xf32>
    %200 = arith.subf %196, %199 : vector<16x16xf32>
    %201 = math.exp %200 : vector<16x16xf32>
    %cst_79 = arith.constant dense<0.000000e+00> : vector<16xf32>
    %202 = vector.multi_reduction <add>, %201, %cst_79 [1] : vector<16x16xf32> to vector<16xf32>
    %203 = vector.shape_cast %202 : vector<16xf32> to vector<16x1xf32>
    %204 = tpu.reciprocal %203 {approx = true} : vector<16x1xf32> -> vector<16x1xf32>
    %205 = vector.broadcast %204 : vector<16x1xf32> to vector<16x16xf32>
    %206 = arith.mulf %201, %205 : vector<16x16xf32>
    %cst_80 = arith.constant dense<0.000000e+00> : vector<16x8xf32>
    %207 = tpu.matmul %206, %194, %cst_80 {dimension_numbers = #tpu.dot_dimension_numbers<[1], [0], [0], [1], [0, 0, 1, 1], [], []>} : vector<16x16xf32>, vector<16x8xf32>, vector<16x8xf32> -> vector<16x8xf32>
    %208 = vector.extract_strided_slice %191 {offsets = [0, 8], sizes = [16, 8], strides = [1, 1]} : vector<32x96xf32> to vector<16x8xf32>
    %209 = vector.extract_strided_slice %191 {offsets = [0, 40], sizes = [16, 8], strides = [1, 1]} : vector<32x96xf32> to vector<16x8xf32>
    %210 = vector.extract_strided_slice %191 {offsets = [0, 72], sizes = [16, 8], strides = [1, 1]} : vector<32x96xf32> to vector<16x8xf32>
    %cst_81 = arith.constant dense<0.000000e+00> : vector<16x16xf32>
    %211 = tpu.matmul %208, %209, %cst_81 {dimension_numbers = #tpu.dot_dimension_numbers<[1], [1], [0], [0], [0, 0, 1, 0], [], []>} : vector<16x8xf32>, vector<16x8xf32>, vector<16x16xf32> -> vector<16x16xf32>
    %212 = arith.addf %211, %5 : vector<16x16xf32>
    %cst_82 = arith.constant dense<0xFF800000> : vector<16xf32>
    %213 = vector.multi_reduction <maximumf>, %212, %cst_82 [1] : vector<16x16xf32> to vector<16xf32>
    %214 = vector.shape_cast %213 : vector<16xf32> to vector<16x1xf32>
    %215 = vector.broadcast %214 : vector<16x1xf32> to vector<16x16xf32>
    %216 = arith.subf %212, %215 : vector<16x16xf32>
    %217 = math.exp %216 : vector<16x16xf32>
    %cst_83 = arith.constant dense<0.000000e+00> : vector<16xf32>
    %218 = vector.multi_reduction <add>, %217, %cst_83 [1] : vector<16x16xf32> to vector<16xf32>
    %219 = vector.shape_cast %218 : vector<16xf32> to vector<16x1xf32>
    %220 = tpu.reciprocal %219 {approx = true} : vector<16x1xf32> -> vector<16x1xf32>
    %221 = vector.broadcast %220 : vector<16x1xf32> to vector<16x16xf32>
    %222 = arith.mulf %217, %221 : vector<16x16xf32>
    %cst_84 = arith.constant dense<0.000000e+00> : vector<16x8xf32>
    %223 = tpu.matmul %222, %210, %cst_84 {dimension_numbers = #tpu.dot_dimension_numbers<[1], [0], [0], [1], [0, 0, 1, 1], [], []>} : vector<16x16xf32>, vector<16x8xf32>, vector<16x8xf32> -> vector<16x8xf32>
    %224 = vector.extract_strided_slice %191 {offsets = [0, 16], sizes = [16, 8], strides = [1, 1]} : vector<32x96xf32> to vector<16x8xf32>
    %225 = vector.extract_strided_slice %191 {offsets = [0, 48], sizes = [16, 8], strides = [1, 1]} : vector<32x96xf32> to vector<16x8xf32>
    %226 = vector.extract_strided_slice %191 {offsets = [0, 80], sizes = [16, 8], strides = [1, 1]} : vector<32x96xf32> to vector<16x8xf32>
    %cst_85 = arith.constant dense<0.000000e+00> : vector<16x16xf32>
    %227 = tpu.matmul %224, %225, %cst_85 {dimension_numbers = #tpu.dot_dimension_numbers<[1], [1], [0], [0], [0, 0, 1, 0], [], []>} : vector<16x8xf32>, vector<16x8xf32>, vector<16x16xf32> -> vector<16x16xf32>
    %228 = arith.addf %227, %5 : vector<16x16xf32>
    %cst_86 = arith.constant dense<0xFF800000> : vector<16xf32>
    %229 = vector.multi_reduction <maximumf>, %228, %cst_86 [1] : vector<16x16xf32> to vector<16xf32>
    %230 = vector.shape_cast %229 : vector<16xf32> to vector<16x1xf32>
    %231 = vector.broadcast %230 : vector<16x1xf32> to vector<16x16xf32>
    %232 = arith.subf %228, %231 : vector<16x16xf32>
    %233 = math.exp %232 : vector<16x16xf32>
    %cst_87 = arith.constant dense<0.000000e+00> : vector<16xf32>
    %234 = vector.multi_reduction <add>, %233, %cst_87 [1] : vector<16x16xf32> to vector<16xf32>
    %235 = vector.shape_cast %234 : vector<16xf32> to vector<16x1xf32>
    %236 = tpu.reciprocal %235 {approx = true} : vector<16x1xf32> -> vector<16x1xf32>
    %237 = vector.broadcast %236 : vector<16x1xf32> to vector<16x16xf32>
    %238 = arith.mulf %233, %237 : vector<16x16xf32>
    %cst_88 = arith.constant dense<0.000000e+00> : vector<16x8xf32>
    %239 = tpu.matmul %238, %226, %cst_88 {dimension_numbers = #tpu.dot_dimension_numbers<[1], [0], [0], [1], [0, 0, 1, 1], [], []>} : vector<16x16xf32>, vector<16x8xf32>, vector<16x8xf32> -> vector<16x8xf32>
    %240 = vector.extract_strided_slice %191 {offsets = [0, 24], sizes = [16, 8], strides = [1, 1]} : vector<32x96xf32> to vector<16x8xf32>
    %241 = vector.extract_strided_slice %191 {offsets = [0, 56], sizes = [16, 8], strides = [1, 1]} : vector<32x96xf32> to vector<16x8xf32>
    %242 = vector.extract_strided_slice %191 {offsets = [0, 88], sizes = [16, 8], strides = [1, 1]} : vector<32x96xf32> to vector<16x8xf32>
    %cst_89 = arith.constant dense<0.000000e+00> : vector<16x16xf32>
    %243 = tpu.matmul %240, %241, %cst_89 {dimension_numbers = #tpu.dot_dimension_numbers<[1], [1], [0], [0], [0, 0, 1, 0], [], []>} : vector<16x8xf32>, vector<16x8xf32>, vector<16x16xf32> -> vector<16x16xf32>
    %244 = arith.addf %243, %5 : vector<16x16xf32>
    %cst_90 = arith.constant dense<0xFF800000> : vector<16xf32>
    %245 = vector.multi_reduction <maximumf>, %244, %cst_90 [1] : vector<16x16xf32> to vector<16xf32>
    %246 = vector.shape_cast %245 : vector<16xf32> to vector<16x1xf32>
    %247 = vector.broadcast %246 : vector<16x1xf32> to vector<16x16xf32>
    %248 = arith.subf %244, %247 : vector<16x16xf32>
    %249 = math.exp %248 : vector<16x16xf32>
    %cst_91 = arith.constant dense<0.000000e+00> : vector<16xf32>
    %250 = vector.multi_reduction <add>, %249, %cst_91 [1] : vector<16x16xf32> to vector<16xf32>
    %251 = vector.shape_cast %250 : vector<16xf32> to vector<16x1xf32>
    %252 = tpu.reciprocal %251 {approx = true} : vector<16x1xf32> -> vector<16x1xf32>
    %253 = vector.broadcast %252 : vector<16x1xf32> to vector<16x16xf32>
    %254 = arith.mulf %249, %253 : vector<16x16xf32>
    %cst_92 = arith.constant dense<0.000000e+00> : vector<16x8xf32>
    %255 = tpu.matmul %254, %242, %cst_92 {dimension_numbers = #tpu.dot_dimension_numbers<[1], [0], [0], [1], [0, 0, 1, 1], [], []>} : vector<16x16xf32>, vector<16x8xf32>, vector<16x8xf32> -> vector<16x8xf32>
    %256 = tpu.concatenate %207, %223, %239, %255 in 1 : vector<16x8xf32>, vector<16x8xf32>, vector<16x8xf32>, vector<16x8xf32> -> vector<16x32xf32>
    %257 = vector.extract_strided_slice %191 {offsets = [16, 0], sizes = [16, 8], strides = [1, 1]} : vector<32x96xf32> to vector<16x8xf32>
    %258 = vector.extract_strided_slice %191 {offsets = [16, 32], sizes = [16, 8], strides = [1, 1]} : vector<32x96xf32> to vector<16x8xf32>
    %259 = vector.extract_strided_slice %191 {offsets = [16, 64], sizes = [16, 8], strides = [1, 1]} : vector<32x96xf32> to vector<16x8xf32>
    %cst_93 = arith.constant dense<0.000000e+00> : vector<16x16xf32>
    %260 = tpu.matmul %257, %258, %cst_93 {dimension_numbers = #tpu.dot_dimension_numbers<[1], [1], [0], [0], [0, 0, 1, 0], [], []>} : vector<16x8xf32>, vector<16x8xf32>, vector<16x16xf32> -> vector<16x16xf32>
    %261 = arith.addf %260, %5 : vector<16x16xf32>
    %cst_94 = arith.constant dense<0xFF800000> : vector<16xf32>
    %262 = vector.multi_reduction <maximumf>, %261, %cst_94 [1] : vector<16x16xf32> to vector<16xf32>
    %263 = vector.shape_cast %262 : vector<16xf32> to vector<16x1xf32>
    %264 = vector.broadcast %263 : vector<16x1xf32> to vector<16x16xf32>
    %265 = arith.subf %261, %264 : vector<16x16xf32>
    %266 = math.exp %265 : vector<16x16xf32>
    %cst_95 = arith.constant dense<0.000000e+00> : vector<16xf32>
    %267 = vector.multi_reduction <add>, %266, %cst_95 [1] : vector<16x16xf32> to vector<16xf32>
    %268 = vector.shape_cast %267 : vector<16xf32> to vector<16x1xf32>
    %269 = tpu.reciprocal %268 {approx = true} : vector<16x1xf32> -> vector<16x1xf32>
    %270 = vector.broadcast %269 : vector<16x1xf32> to vector<16x16xf32>
    %271 = arith.mulf %266, %270 : vector<16x16xf32>
    %cst_96 = arith.constant dense<0.000000e+00> : vector<16x8xf32>
    %272 = tpu.matmul %271, %259, %cst_96 {dimension_numbers = #tpu.dot_dimension_numbers<[1], [0], [0], [1], [0, 0, 1, 1], [], []>} : vector<16x16xf32>, vector<16x8xf32>, vector<16x8xf32> -> vector<16x8xf32>
    %273 = vector.extract_strided_slice %191 {offsets = [16, 8], sizes = [16, 8], strides = [1, 1]} : vector<32x96xf32> to vector<16x8xf32>
    %274 = vector.extract_strided_slice %191 {offsets = [16, 40], sizes = [16, 8], strides = [1, 1]} : vector<32x96xf32> to vector<16x8xf32>
    %275 = vector.extract_strided_slice %191 {offsets = [16, 72], sizes = [16, 8], strides = [1, 1]} : vector<32x96xf32> to vector<16x8xf32>
    %cst_97 = arith.constant dense<0.000000e+00> : vector<16x16xf32>
    %276 = tpu.matmul %273, %274, %cst_97 {dimension_numbers = #tpu.dot_dimension_numbers<[1], [1], [0], [0], [0, 0, 1, 0], [], []>} : vector<16x8xf32>, vector<16x8xf32>, vector<16x16xf32> -> vector<16x16xf32>
    %277 = arith.addf %276, %5 : vector<16x16xf32>
    %cst_98 = arith.constant dense<0xFF800000> : vector<16xf32>
    %278 = vector.multi_reduction <maximumf>, %277, %cst_98 [1] : vector<16x16xf32> to vector<16xf32>
    %279 = vector.shape_cast %278 : vector<16xf32> to vector<16x1xf32>
    %280 = vector.broadcast %279 : vector<16x1xf32> to vector<16x16xf32>
    %281 = arith.subf %277, %280 : vector<16x16xf32>
    %282 = math.exp %281 : vector<16x16xf32>
    %cst_99 = arith.constant dense<0.000000e+00> : vector<16xf32>
    %283 = vector.multi_reduction <add>, %282, %cst_99 [1] : vector<16x16xf32> to vector<16xf32>
    %284 = vector.shape_cast %283 : vector<16xf32> to vector<16x1xf32>
    %285 = tpu.reciprocal %284 {approx = true} : vector<16x1xf32> -> vector<16x1xf32>
    %286 = vector.broadcast %285 : vector<16x1xf32> to vector<16x16xf32>
    %287 = arith.mulf %282, %286 : vector<16x16xf32>
    %cst_100 = arith.constant dense<0.000000e+00> : vector<16x8xf32>
    %288 = tpu.matmul %287, %275, %cst_100 {dimension_numbers = #tpu.dot_dimension_numbers<[1], [0], [0], [1], [0, 0, 1, 1], [], []>} : vector<16x16xf32>, vector<16x8xf32>, vector<16x8xf32> -> vector<16x8xf32>
    %289 = vector.extract_strided_slice %191 {offsets = [16, 16], sizes = [16, 8], strides = [1, 1]} : vector<32x96xf32> to vector<16x8xf32>
    %290 = vector.extract_strided_slice %191 {offsets = [16, 48], sizes = [16, 8], strides = [1, 1]} : vector<32x96xf32> to vector<16x8xf32>
    %291 = vector.extract_strided_slice %191 {offsets = [16, 80], sizes = [16, 8], strides = [1, 1]} : vector<32x96xf32> to vector<16x8xf32>
    %cst_101 = arith.constant dense<0.000000e+00> : vector<16x16xf32>
    %292 = tpu.matmul %289, %290, %cst_101 {dimension_numbers = #tpu.dot_dimension_numbers<[1], [1], [0], [0], [0, 0, 1, 0], [], []>} : vector<16x8xf32>, vector<16x8xf32>, vector<16x16xf32> -> vector<16x16xf32>
    %293 = arith.addf %292, %5 : vector<16x16xf32>
    %cst_102 = arith.constant dense<0xFF800000> : vector<16xf32>
    %294 = vector.multi_reduction <maximumf>, %293, %cst_102 [1] : vector<16x16xf32> to vector<16xf32>
    %295 = vector.shape_cast %294 : vector<16xf32> to vector<16x1xf32>
    %296 = vector.broadcast %295 : vector<16x1xf32> to vector<16x16xf32>
    %297 = arith.subf %293, %296 : vector<16x16xf32>
    %298 = math.exp %297 : vector<16x16xf32>
    %cst_103 = arith.constant dense<0.000000e+00> : vector<16xf32>
    %299 = vector.multi_reduction <add>, %298, %cst_103 [1] : vector<16x16xf32> to vector<16xf32>
    %300 = vector.shape_cast %299 : vector<16xf32> to vector<16x1xf32>
    %301 = tpu.reciprocal %300 {approx = true} : vector<16x1xf32> -> vector<16x1xf32>
    %302 = vector.broadcast %301 : vector<16x1xf32> to vector<16x16xf32>
    %303 = arith.mulf %298, %302 : vector<16x16xf32>
    %cst_104 = arith.constant dense<0.000000e+00> : vector<16x8xf32>
    %304 = tpu.matmul %303, %291, %cst_104 {dimension_numbers = #tpu.dot_dimension_numbers<[1], [0], [0], [1], [0, 0, 1, 1], [], []>} : vector<16x16xf32>, vector<16x8xf32>, vector<16x8xf32> -> vector<16x8xf32>
    %305 = vector.extract_strided_slice %191 {offsets = [16, 24], sizes = [16, 8], strides = [1, 1]} : vector<32x96xf32> to vector<16x8xf32>
    %306 = vector.extract_strided_slice %191 {offsets = [16, 56], sizes = [16, 8], strides = [1, 1]} : vector<32x96xf32> to vector<16x8xf32>
    %307 = vector.extract_strided_slice %191 {offsets = [16, 88], sizes = [16, 8], strides = [1, 1]} : vector<32x96xf32> to vector<16x8xf32>
    %cst_105 = arith.constant dense<0.000000e+00> : vector<16x16xf32>
    %308 = tpu.matmul %305, %306, %cst_105 {dimension_numbers = #tpu.dot_dimension_numbers<[1], [1], [0], [0], [0, 0, 1, 0], [], []>} : vector<16x8xf32>, vector<16x8xf32>, vector<16x16xf32> -> vector<16x16xf32>
    %309 = arith.addf %308, %5 : vector<16x16xf32>
    %cst_106 = arith.constant dense<0xFF800000> : vector<16xf32>
    %310 = vector.multi_reduction <maximumf>, %309, %cst_106 [1] : vector<16x16xf32> to vector<16xf32>
    %311 = vector.shape_cast %310 : vector<16xf32> to vector<16x1xf32>
    %312 = vector.broadcast %311 : vector<16x1xf32> to vector<16x16xf32>
    %313 = arith.subf %309, %312 : vector<16x16xf32>
    %314 = math.exp %313 : vector<16x16xf32>
    %cst_107 = arith.constant dense<0.000000e+00> : vector<16xf32>
    %315 = vector.multi_reduction <add>, %314, %cst_107 [1] : vector<16x16xf32> to vector<16xf32>
    %316 = vector.shape_cast %315 : vector<16xf32> to vector<16x1xf32>
    %317 = tpu.reciprocal %316 {approx = true} : vector<16x1xf32> -> vector<16x1xf32>
    %318 = vector.broadcast %317 : vector<16x1xf32> to vector<16x16xf32>
    %319 = arith.mulf %314, %318 : vector<16x16xf32>
    %cst_108 = arith.constant dense<0.000000e+00> : vector<16x8xf32>
    %320 = tpu.matmul %319, %307, %cst_108 {dimension_numbers = #tpu.dot_dimension_numbers<[1], [0], [0], [1], [0, 0, 1, 1], [], []>} : vector<16x16xf32>, vector<16x8xf32>, vector<16x8xf32> -> vector<16x8xf32>
    %321 = tpu.concatenate %272, %288, %304, %320 in 1 : vector<16x8xf32>, vector<16x8xf32>, vector<16x8xf32>, vector<16x8xf32> -> vector<16x32xf32>
    %322 = tpu.concatenate %256, %321 in 0 : vector<16x32xf32>, vector<16x32xf32> -> vector<32x32xf32>
    %c1_109 = arith.constant 1 : index
    %c0_110 = arith.constant 0 : index
    %c0_111 = arith.constant 0 : index
    %323 = vector.load %arg6[%c1_109, %c0_110, %c0_111] : memref<2x32x32xbf16, #tpu.memory_space<vmem>>, vector<1x32x32xbf16>
    %324 = vector.shape_cast %323 : vector<1x32x32xbf16> to vector<32x32xbf16>
    %325 = arith.truncf %322 : vector<32x32xf32> to vector<32x32xbf16>
    %cst_112 = arith.constant dense<0.000000e+00> : vector<32x32xf32>
    %326 = tpu.matmul %325, %324, %cst_112 {dimension_numbers = #tpu.dot_dimension_numbers<[1], [0], [0], [1], [0, 0, 1, 1], [], []>} : vector<32x32xbf16>, vector<32x32xbf16>, vector<32x32xf32> -> vector<32x32xf32>
    %c1_113 = arith.constant 1 : index
    %c0_114 = arith.constant 0 : index
    %c0_115 = arith.constant 0 : index
    %327 = vector.load %arg7[%c1_113, %c0_114, %c0_115] : memref<2x1x32xf32, #tpu.memory_space<vmem>>, vector<1x1x32xf32>
    %328 = vector.shape_cast %327 : vector<1x1x32xf32> to vector<1x32xf32>
    %329 = vector.broadcast %328 : vector<1x32xf32> to vector<32x32xf32>
    %330 = arith.addf %326, %329 : vector<32x32xf32>
    %331 = arith.addf %330, %177 : vector<32x32xf32>
    %c2 = arith.constant 2 : index
    %c0_116 = arith.constant 0 : index
    %c0_117 = arith.constant 0 : index
    %332 = vector.load %arg8[%c2, %c0_116, %c0_117] : memref<4x32x32xbf16, #tpu.memory_space<vmem>>, vector<1x32x32xbf16>
    %333 = vector.shape_cast %332 : vector<1x32x32xbf16> to vector<32x32xbf16>
    %334 = arith.truncf %331 : vector<32x32xf32> to vector<32x32xbf16>
    %cst_118 = arith.constant dense<0.000000e+00> : vector<32x32xf32>
    %335 = tpu.matmul %334, %333, %cst_118 {dimension_numbers = #tpu.dot_dimension_numbers<[1], [0], [0], [1], [0, 0, 1, 1], [], []>} : vector<32x32xbf16>, vector<32x32xbf16>, vector<32x32xf32> -> vector<32x32xf32>
    %cst_119 = arith.constant 0.000000e+00 : f32
    %336 = vector.broadcast %cst_119 : f32 to vector<32x32xf32>
    %337 = arith.maximumf %335, %336 : vector<32x32xf32>
    %338 = arith.addf %337, %331 : vector<32x32xf32>
    %c3 = arith.constant 3 : index
    %c0_120 = arith.constant 0 : index
    %c0_121 = arith.constant 0 : index
    %339 = vector.load %arg8[%c3, %c0_120, %c0_121] : memref<4x32x32xbf16, #tpu.memory_space<vmem>>, vector<1x32x32xbf16>
    %340 = vector.shape_cast %339 : vector<1x32x32xbf16> to vector<32x32xbf16>
    %341 = arith.truncf %338 : vector<32x32xf32> to vector<32x32xbf16>
    %cst_122 = arith.constant dense<0.000000e+00> : vector<32x32xf32>
    %342 = tpu.matmul %341, %340, %cst_122 {dimension_numbers = #tpu.dot_dimension_numbers<[1], [0], [0], [1], [0, 0, 1, 1], [], []>} : vector<32x32xbf16>, vector<32x32xbf16>, vector<32x32xf32> -> vector<32x32xf32>
    %cst_123 = arith.constant 0.000000e+00 : f32
    %343 = vector.broadcast %cst_123 : f32 to vector<32x32xf32>
    %344 = arith.maximumf %342, %343 : vector<32x32xf32>
    %345 = arith.addf %344, %331 : vector<32x32xf32>
    %c0_124 = arith.constant 0 : index
    %c0_125 = arith.constant 0 : index
    %346 = vector.load %arg9[%c0_124, %c0_125] : memref<32x32xf32, #tpu.memory_space<vmem>>, vector<32x32xf32>
    tpu.vector_store %arg9[%c0_124, %c0_125], %345 {strides = array<i32>} : memref<32x32xf32, #tpu.memory_space<vmem>>, vector<32x32xf32>,
    return
  }
  func.func @transform_0(%arg0: i32) -> (i32, i32) {
    %c0_i32 = arith.constant 0 : i32
    %c0_i32_0 = arith.constant 0 : i32
    %c0_i32_1 = arith.constant 0 : i32
    return %c0_i32, %c0_i32_0 : i32, i32
  }
  func.func @transform_1(%arg0: i32) -> (i32, i32) {
    %c0_i32 = arith.constant 0 : i32
    %c0_i32_0 = arith.constant 0 : i32
    %c0_i32_1 = arith.constant 0 : i32
    return %c0_i32, %c0_i32_0 : i32, i32
  }
  func.func @transform_2(%arg0: i32) -> (i32, i32, i32) {
    %c0_i32 = arith.constant 0 : i32
    %c0_i32_0 = arith.constant 0 : i32
    %c0_i32_1 = arith.constant 0 : i32
    %c0_i32_2 = arith.constant 0 : i32
    return %c0_i32, %c0_i32_0, %c0_i32_1 : i32, i32, i32
  }
  func.func @transform_3(%arg0: i32) -> (i32, i32, i32) {
    %c0_i32 = arith.constant 0 : i32
    %c0_i32_0 = arith.constant 0 : i32
    %c0_i32_1 = arith.constant 0 : i32
    %c0_i32_2 = arith.constant 0 : i32
    return %c0_i32, %c0_i32_0, %c0_i32_1 : i32, i32, i32
  }
  func.func @transform_4(%arg0: i32) -> (i32, i32, i32) {
    %c0_i32 = arith.constant 0 : i32
    %c0_i32_0 = arith.constant 0 : i32
    %c0_i32_1 = arith.constant 0 : i32
    %c0_i32_2 = arith.constant 0 : i32
    return %c0_i32, %c0_i32_0, %c0_i32_1 : i32, i32, i32
  }
  func.func @transform_5(%arg0: i32) -> (i32, i32, i32) {
    %c0_i32 = arith.constant 0 : i32
    %c0_i32_0 = arith.constant 0 : i32
    %c0_i32_1 = arith.constant 0 : i32
    %c0_i32_2 = arith.constant 0 : i32
    return %c0_i32, %c0_i32_0, %c0_i32_1 : i32, i32, i32
  }
  func.func @transform_6(%arg0: i32) -> (i32, i32, i32) {
    %c0_i32 = arith.constant 0 : i32
    %c0_i32_0 = arith.constant 0 : i32
    %c0_i32_1 = arith.constant 0 : i32
    %c0_i32_2 = arith.constant 0 : i32
    return %c0_i32, %c0_i32_0, %c0_i32_1 : i32, i32, i32
  }
  func.func @transform_7(%arg0: i32) -> (i32, i32, i32) {
    %c0_i32 = arith.constant 0 : i32
    %c0_i32_0 = arith.constant 0 : i32
    %c0_i32_1 = arith.constant 0 : i32
    %c0_i32_2 = arith.constant 0 : i32
    return %c0_i32, %c0_i32_0, %c0_i32_1 : i32, i32, i32
  }
  func.func @transform_8(%arg0: i32) -> (i32, i32) {
    %c0_i32 = arith.constant 0 : i32
    %c0_i32_0 = arith.constant 0 : i32
    %c0_i32_1 = arith.constant 0 : i32
    return %c0_i32, %c0_i32_0 : i32, i32
  }
}

</mosaic_0001>

<llo_original>
// kernel: transformer_block_forward.1
$region0: #{transformer_block_forward.1}
  #allocation0 [shape = 'u32[]', space=smem, size = 0x4, offset = 0x4, fixed_abs, tag = 'smem constant byte address 0x4 - core index']
  #allocation1 [shape = 'u32[72,128]{1,0:T(1,128)}', space=vmem, size = 0x9000, scoped, tag = 'internal scratch']
  %s0 = inlined_call_operand.vmem [shape: f32[32,32], index: 0, kind: input, shape index: {}]
  %s1 = inlined_call_operand.vmem [shape: bf16[32,32], index: 1, kind: input, shape index: {}]
  %s2 = inlined_call_operand.vmem [shape: bf16[2,32,96], index: 2, kind: input, shape index: {}]
  %s3 = inlined_call_operand.hbm [shape: bf16[2,96,96], index: 3, kind: input, shape index: {}]
  %s4 = inlined_call_operand.vmem [shape: f32[2,1,96], index: 4, kind: input, shape index: {}]
  %s5 = inlined_call_operand.hbm [shape: bf16[2,32,32], index: 5, kind: input, shape index: {}]
  %s6 = inlined_call_operand.vmem [shape: f32[2,1,32], index: 6, kind: input, shape index: {}]
  %s7 = inlined_call_operand.hbm [shape: bf16[4,32,32], index: 7, kind: input, shape index: {}]
  %s8 = inlined_call_operand.vmem [shape: f32[32,32], index: 8, kind: output, shape index: {}]
  %s9 = sld [smem:[#allocation0]]
  $region54: #{transformer_block_forward.1} parent=0
    _
  %s11 = ssub.s32 1, %s9
  %s12 = scalar_select 0, %s11, %s9
  $region1: #{transformer_block_forward.1} parent=0
    #allocation2 [shape = 'u8[49152]{0}', space=vmem, size = 0xc000, scoped, tag = 'input window, operand 3, single buffered']
    #allocation3 [shape = 's32[1]{0}', space=sflag, size = 0x4, scoped, tag = 'scoped memory for transformer_block_forward.1']
    #allocation4 [shape = 'u8[16384]{0}', space=vmem, size = 0x4000, scoped, tag = 'input window, operand 5, single buffered']
    #allocation5 [shape = 's32[1]{0}', space=sflag, size = 0x4, scoped, tag = 'scoped memory for transformer_block_forward.1']
    #allocation6 [shape = 'u8[32768]{0}', space=vmem, size = 0x8000, scoped, tag = 'input window, operand 7, single buffered']
    %13 = vsyncpa [#allocation3], 0
    %14 = vsyncpa [#allocation5], 0
    // Predicated region
    $region2: #{transformer_block_forward.1} parent=1 // pred_check
      _
    $region3: #{transformer_block_forward.1} parent=1 // pred_check_branch
      %16 = sbr.rel (0) target = $region5
    $region4: #{transformer_block_forward.1} parent=1 // pred_region
      _
    $region5: #{transformer_block_forward.1} parent=1 // pred_fallthru
      _
    // Predicated region
    $region6: #{transformer_block_forward.1} parent=1 // pred_check
      _
    $region7: #{transformer_block_forward.1} parent=1 // pred_check_branch
      %18 = sbr.rel (0) target = $region9
    $region8: #{transformer_block_forward.1} parent=1 // pred_region
      _
    $region9: #{transformer_block_forward.1} parent=1 // pred_fallthru
      _
    // Predicated region
    $region10: #{transformer_block_forward.1} parent=1 // pred_check
      _
    $region11: #{transformer_block_forward.1} parent=1 // pred_check_branch
      %20 = sbr.rel (0) target = $region13
    $region12: #{transformer_block_forward.1} parent=1 // pred_region
      _
    $region13: #{transformer_block_forward.1} parent=1 // pred_fallthru
      _
    // Predicated region
    $region14: #{transformer_block_forward.1} parent=1 // pred_check
      _
    $region15: #{transformer_block_forward.1} parent=1 // pred_check_branch
      %22 = sbr.rel (0) target = $region17
    $region16: #{transformer_block_forward.1} parent=1 // pred_region
      %24 = vsyncadd [#allocation3], 0
      %s25 = sshll.u32 %s3, 4
      %s26 = int_to_ptr.hbm [resolvable:$true] %s25
      %s27 = sshll.u32 [#allocation2], 4
      %s28 = int_to_ptr.vmem [resolvable:$true] %s27
      %33 = dma.hbm_to_vmem [thread:$0]  %s26, 1536, %s28, [#allocation3], 64, 64, 4
    $region17: #{transformer_block_forward.1} parent=1 // pred_fallthru
      _
    // Predicated region
    $region18: #{transformer_block_forward.1} parent=1 // pred_check
      _
    $region19: #{transformer_block_forward.1} parent=1 // pred_check_branch
      %35 = sbr.rel (0) target = $region21
    $region20: #{transformer_block_forward.1} parent=1 // pred_region
      _
    $region21: #{transformer_block_forward.1} parent=1 // pred_fallthru
      _
    // Predicated region
    $region22: #{transformer_block_forward.1} parent=1 // pred_check
      _
    $region23: #{transformer_block_forward.1} parent=1 // pred_check_branch
      %37 = sbr.rel (0) target = $region25
    $region24: #{transformer_block_forward.1} parent=1 // pred_region
      %39 = vsyncadd [#allocation5], 0
      %s40 = sshll.u32 %s5, 4
      %s41 = int_to_ptr.hbm [resolvable:$true] %s40
      %s42 = sshll.u32 [#allocation4], 4
      %s43 = int_to_ptr.vmem [resolvable:$true] %s42
      %48 = dma.hbm_to_vmem [thread:$0]  %s41, 512, %s43, [#allocation5], 64, 64, 4
    $region25: #{transformer_block_forward.1} parent=1 // pred_fallthru
      _
    // Predicated region
    $region26: #{transformer_block_forward.1} parent=1 // pred_check
      _
    $region27: #{transformer_block_forward.1} parent=1 // pred_check_branch
      %50 = sbr.rel (0) target = $region29
    $region28: #{transformer_block_forward.1} parent=1 // pred_region
      _
    $region29: #{transformer_block_forward.1} parent=1 // pred_fallthru
      _
    // Predicated region
    $region30: #{transformer_block_forward.1} parent=1 // pred_check
      _
    $region31: #{transformer_block_forward.1} parent=1 // pred_check_branch
      %52 = sbr.rel (0) target = $region33
    $region32: #{transformer_block_forward.1} parent=1 // pred_region
      %54 = vsyncadd [#allocation5], 0
      %s55 = sshll.u32 %s7, 4
      %s56 = int_to_ptr.hbm [resolvable:$true] %s55
      %s57 = sshll.u32 [#allocation6], 4
      %s58 = int_to_ptr.vmem [resolvable:$true] %s57
      %63 = dma.hbm_to_vmem [thread:$0]  %s56, 1024, %s58, [#allocation5], 64, 64, 4
    $region33: #{transformer_block_forward.1} parent=1 // pred_fallthru
      _
    // Predicated region
    $region34: #{transformer_block_forward.1} parent=1 // pred_check
      _
    $region35: #{transformer_block_forward.1} parent=1 // pred_check_branch
      %65 = sbr.rel (0) target = $region37
    $region36: #{transformer_block_forward.1} parent=1 // pred_region
      %67 = dma.done [#allocation3], 1536
    $region37: #{transformer_block_forward.1} parent=1 // pred_fallthru
      _
    // Predicated region
    $region38: #{transformer_block_forward.1} parent=1 // pred_check
      _
    $region39: #{transformer_block_forward.1} parent=1 // pred_check_branch
      %69 = sbr.rel (0) target = $region41
    $region40: #{transformer_block_forward.1} parent=1 // pred_region
      %71 = dma.done [#allocation5], 512
    $region41: #{transformer_block_forward.1} parent=1 // pred_fallthru
      _
    // Predicated region
    $region42: #{transformer_block_forward.1} parent=1 // pred_check
      _
    $region43: #{transformer_block_forward.1} parent=1 // pred_check_branch
      %73 = sbr.rel (0) target = $region45
    $region44: #{transformer_block_forward.1} parent=1 // pred_region
      %75 = dma.done [#allocation5], 1024
    $region45: #{transformer_block_forward.1} parent=1 // pred_fallthru
      _
    %v77 = vlaneseq
    %v78 = vand.u32 %v77, 127
    %vm79 = vcmp.lt.s32.totalorder %v78, 9
    %v80 = vsel %vm79, 0.0, -1e+30
    %v81 = vld [vmem:[%s0] sm:$0xff]
    %v82 = vld [vmem:[%s0 + $0x8] sm:$0xff]
    %v83 = vld [vmem:[%s0 + $0x10] sm:$0xff]
    %v84 = vld [vmem:[%s0 + $0x18] sm:$0xff]
    %v85 = vld [vmem:[%s1] sm:$0xf]
    %v86 = vld [vmem:[%s1 + $0x4] sm:$0xf]
    %v87 = vld [vmem:[%s1 + $0x8] sm:$0xf]
    %v88 = vld [vmem:[%s1 + $0xc] sm:$0xf]
    %v89 = vpack.c.bf16 %v82, %v81
    %v90 = vpack.c.bf16 %v84, %v83
    %v95 = vunpack.c.l.b16 %v85
    %v96 = vunpack.c.l.b16 %v86
    %v97 = vunpack.c.l.b16 %v87
    %v98 = vunpack.c.l.b16 %v88
    %v99 = vpack.c.b16 %v96, %v95
    %v100 = vpack.c.b16 %v98, %v97
    %vm103 = vcmask 261120
    %v105 = vsel %vm103, %v89, 0
    %v108 = vsel %vm103, %v90, 0
    %110 = vmatpush.bf16.msra.mxu0 0
    %111 = vmatpush.bf16.msra.mxu0 0
    %112 = vmatpush.bf16.msra.mxu0 0
    %113 = vmatpush.bf16.msra.mxu0 0
    %114 = vmatpush.bf16.msra.mxu0 0
    %115 = vmatpush.bf16.msra.mxu0 0
    %116 = vmatpush.bf16.msra.mxu0 %v100
    %117 = vmatpush.bf16.msra.mxu0 %v99
    %118 = vmatmul.bf16.gmra.mxu0 %v105
    %v119 = vpop.f32.mrf.mxu0
    %v120 = vadd.f32 0.0, %v119
    %v121 = vpop.f32.mrf.mxu0
    %v122 = vadd.f32 0.0, %v121
    %123 = vmatmul.bf16.gmra.mxu0 %v108
    %v124 = vpop.f32.mrf.mxu0
    %v125 = vadd.f32 0.0, %v124
    %v126 = vpop.f32.mrf.mxu0
    %v127 = vadd.f32 0.0, %v126
    %128 = vdwg.mxu0
    %v129 = vld [vmem:[%s2] sm:$0xf]
    %v130 = vld [vmem:[%s2 + $0x4] sm:$0xf]
    %v131 = vld [vmem:[%s2 + $0x8] sm:$0xf]
    %v132 = vld [vmem:[%s2 + $0xc] sm:$0xf]
    %v133 = vpack.c.bf16 %v122, %v120
    %v134 = vpack.c.bf16 %v127, %v125
    %v139 = vunpack.c.l.b16 %v129
    %v140 = vunpack.c.l.b16 %v130
    %v141 = vunpack.c.l.b16 %v131
    %v142 = vunpack.c.l.b16 %v132
    %v143 = vpack.c.b16 %v140, %v139
    %v144 = vpack.c.b16 %v142, %v141
    %v148 = vsel %vm103, %v133, 0
    %v151 = vsel %vm103, %v134, 0
    %153 = vmatpush.bf16.msra.mxu0 0
    %154 = vmatpush.bf16.msra.mxu0 0
    %155 = vmatpush.bf16.msra.mxu0 0
    %156 = vmatpush.bf16.msra.mxu0 0
    %157 = vmatpush.bf16.msra.mxu0 0
    %158 = vmatpush.bf16.msra.mxu0 0
    %159 = vmatpush.bf16.msra.mxu0 %v144
    %160 = vmatpush.bf16.msra.mxu0 %v143
    %161 = vmatmul.bf16.gmra.mxu0 %v148
    %v162 = vpop.f32.mrf.mxu0
    %v163 = vadd.f32 0.0, %v162
    %v164 = vpop.f32.mrf.mxu0
    %v165 = vadd.f32 0.0, %v164
    %166 = vmatmul.bf16.gmra.mxu0 %v151
    %v167 = vpop.f32.mrf.mxu0
    %v168 = vadd.f32 0.0, %v167
    %v169 = vpop.f32.mrf.mxu0
    %v170 = vadd.f32 0.0, %v169
    %171 = vdwg.mxu0
    %v172 = vmax.f32 %v163, 0.0
    %v173 = vmax.f32 %v165, 0.0
    %v174 = vmax.f32 %v168, 0.0
    %v175 = vmax.f32 %v170, 0.0
    %v176 = vld [vmem:[#allocation2] sm:$0xf]
    %v177 = vld [vmem:[#allocation2 + $0x4] sm:$0xf]
    %v178 = vld [vmem:[#allocation2 + $0x8] sm:$0xf]
    %v179 = vld [vmem:[#allocation2 + $0xc] sm:$0xf]
    %v180 = vld [vmem:[#allocation2 + $0x10] sm:$0xf]
    %v181 = vld [vmem:[#allocation2 + $0x14] sm:$0xf]
    %v182 = vld [vmem:[#allocation2 + $0x18] sm:$0xf]
    %v183 = vld [vmem:[#allocation2 + $0x1c] sm:$0xf]
    %v184 = vld [vmem:[#allocation2 + $0x20] sm:$0xf]
    %v185 = vld [vmem:[#allocation2 + $0x24] sm:$0xf]
    %v186 = vld [vmem:[#allocation2 + $0x28] sm:$0xf]
    %v187 = vld [vmem:[#allocation2 + $0x2c] sm:$0xf]
    %v188 = vpack.c.bf16 %v173, %v172
    %v189 = vpack.c.bf16 %v175, %v174
    %v190 = vld [vmem:[%s4] sm:$0x1]
    %v192 = vperm.slane %v190, 0
    %v206 = vunpack.c.l.b16 %v176
    %v207 = vunpack.c.l.b16 %v177
    %v208 = vunpack.c.l.b16 %v178
    %v209 = vunpack.c.l.b16 %v179
    %v210 = vunpack.c.l.b16 %v180
    %v211 = vunpack.c.l.b16 %v181
    %v212 = vunpack.c.l.b16 %v182
    %v213 = vunpack.c.l.b16 %v183
    %v214 = vunpack.c.l.b16 %v184
    %v215 = vunpack.c.l.b16 %v185
    %v216 = vunpack.c.l.b16 %v186
    %v217 = vunpack.c.l.b16 %v187
    %v218 = vpack.c.b16 %v207, %v206
    %v219 = vpack.c.b16 %v209, %v208
    %v220 = vpack.c.b16 %v211, %v210
    %v221 = vpack.c.b16 %v213, %v212
    %v222 = vpack.c.b16 %v215, %v214
    %v223 = vpack.c.b16 %v217, %v216
    %vm230 = vcmask 785408
    %v232 = vsel %vm230, %v188, 0
    %v235 = vsel %vm230, %v189, 0
    %237 = vmatpush.bf16.msra.mxu0 0
    %238 = vmatpush.bf16.msra.mxu0 0
    %239 = vmatpush.bf16.msra.mxu0 %v223
    %240 = vmatpush.bf16.msra.mxu0 %v222
    %241 = vmatpush.bf16.msra.mxu0 %v221
    %242 = vmatpush.bf16.msra.mxu0 %v220
    %243 = vmatpush.bf16.msra.mxu0 %v219
    %244 = vmatpush.bf16.msra.mxu0 %v218
    %245 = vmatmul.bf16.gmra.mxu0 %v232
    %v246 = vpop.f32.mrf.mxu0
    %v247 = vadd.f32 %v192, %v246
    %v248 = vpop.f32.mrf.mxu0
    %v249 = vadd.f32 %v192, %v248
    %250 = vmatmul.bf16.gmra.mxu0 %v235
    %v251 = vpop.f32.mrf.mxu0
    %v252 = vadd.f32 %v192, %v251
    %v253 = vpop.f32.mrf.mxu0
    %v254 = vadd.f32 %v192, %v253
    %255 = vdwg.mxu0
    %258 = vrot.lane.b32.xlu0 %v247, 96
    %v259 = vpop.permute.xlu0 %258
    %260 = vrot.lane.b32.xlu0 %v249, 96
    %v261 = vpop.permute.xlu0 %260
    %vm262 = vcmask 64512
    %v263 = vsel %vm262, %v247, 0
    %v265 = vsel %vm262, %v249, 0
    %v267 = vsel %vm262, %v259, 0
    %v269 = vsel %vm262, %v261, 0
    %271 = vmatpush.xpose.msra.mxu0 0.0
    %272 = vmatpush.xpose.msra.mxu0 0.0
    %273 = vmatpush.xpose.msra.mxu0 0.0
    %274 = vmatpush.xpose.msra.mxu0 0.0
    %275 = vmatpush.xpose.msra.mxu0 0.0
    %276 = vmatpush.xpose.msra.mxu0 0.0
    %277 = vmatpush.xpose.msra.mxu0 0.0
    %278 = vmatpush.xpose.msra.mxu0 0.0
    %279 = vmatpush.xpose.msra.mxu0 0.0
    %280 = vmatpush.xpose.msra.mxu0 0.0
    %281 = vmatpush.xpose.msra.mxu0 0.0
    %282 = vmatpush.xpose.msra.mxu0 0.0
    %283 = vmatpush.xpose.msra.mxu0 0.0
    %284 = vmatpush.xpose.msra.mxu0 0.0
    %285 = vmatpush.xpose.msra.mxu0 %v269
    %286 = vmatpush.xpose.msra.mxu0 %v267
    %287 = vmatmul.f32.gmra.mxu0 %v263
    %v288 = vpop.f32.mrf.mxu0
    %v289 = vadd.f32 %v80, %v288
    %290 = vmatmul.f32.gmra.mxu0 %v265
    %v291 = vpop.f32.mrf.mxu0
    %v292 = vadd.f32 %v80, %v291
    %293 = vdwg.mxu0
    %vm294 = vcmask 130048
    %v295 = vsel %vm294, %v289, -inf
    %296 = vmax.xlane.f32.xlu0 %v295
    %v297 = vpop.xlane.xlu0 %296
    %v298 = vsel %vm294, %v292, -inf
    %299 = vmax.xlane.f32.xlu0 %v298
    %v300 = vpop.xlane.xlu0 %299
    %v301 = vsub.f32 %v289, %v297
    %v302 = vsub.f32 %v292, %v300
    %v303 = vmul.f32 %v301, 1.442695
    %v304 = vpow.pop %v303
    %v305 = vmul.f32 %v302, 1.442695
    %v306 = vpow.pop %v305
    %v307 = vsel %vm294, %v304, 0.0
    %308 = vadd.xlane.f32.xlu0 %v307
    %v309 = vpop.xlane.xlu0 %308
    %v310 = vsel %vm294, %v306, 0.0
    %311 = vadd.xlane.f32.xlu0 %v310
    %v312 = vpop.xlane.xlu0 %311
    %v313 = vrcp.pop %v309
    %v314 = vrcp.pop %v312
    %v315 = vmul.f32 %v304, %v313
    %v316 = vmul.f32 %v306, %v314
    %317 = vrot.lane.b32.xlu0 %v247, 64
    %v318 = vpop.permute.xlu0 %317
    %319 = vrot.lane.b32.xlu0 %v249, 64
    %v320 = vpop.permute.xlu0 %319
    %v324 = vsel %vm294, %v315, 0
    %v327 = vsel %vm294, %v316, 0
    %329 = vmatpush.msra.mxu0 0.0
    %330 = vmatpush.msra.mxu0 0.0
    %331 = vmatpush.msra.mxu0 0.0
    %332 = vmatpush.msra.mxu0 0.0
    %333 = vmatpush.msra.mxu0 0.0
    %334 = vmatpush.msra.mxu0 0.0
    %335 = vmatpush.msra.mxu0 0.0
    %336 = vmatpush.msra.mxu0 0.0
    %337 = vmatpush.msra.mxu0 0.0
    %338 = vmatpush.msra.mxu0 0.0
    %339 = vmatpush.msra.mxu0 0.0
    %340 = vmatpush.msra.mxu0 0.0
    %341 = vmatpush.msra.mxu0 0.0
    %342 = vmatpush.msra.mxu0 0.0
    %343 = vmatpush.msra.mxu0 %v320
    %344 = vmatpush.msra.mxu0 %v318
    %345 = vmatmul.f32.gmra.mxu0 %v324
    %v346 = vpop.f32.mrf.mxu0
    %v347 = vadd.f32 0.0, %v346
    %348 = vmatmul.f32.gmra.mxu0 %v327
    %v349 = vpop.f32.mrf.mxu0
    %v350 = vadd.f32 0.0, %v349
    %351 = vdwg.mxu0
    %352 = vrot.lane.b32.xlu0 %v247, 120
    %v353 = vpop.permute.xlu0 %352
    %354 = vrot.lane.b32.xlu0 %v249, 120
    %v355 = vpop.permute.xlu0 %354
    %356 = vrot.lane.b32.xlu0 %v247, 88
    %v357 = vpop.permute.xlu0 %356
    %358 = vrot.lane.b32.xlu0 %v249, 88
    %v359 = vpop.permute.xlu0 %358
    %v360 = vsel %vm262, %v353, 0
    %v362 = vsel %vm262, %v355, 0
    %v364 = vsel %vm262, %v357, 0
    %v366 = vsel %vm262, %v359, 0
    %368 = vmatpush.xpose.msra.mxu0 0.0
    %369 = vmatpush.xpose.msra.mxu0 0.0
    %370 = vmatpush.xpose.msra.mxu0 0.0
    %371 = vmatpush.xpose.msra.mxu0 0.0
    %372 = vmatpush.xpose.msra.mxu0 0.0
    %373 = vmatpush.xpose.msra.mxu0 0.0
    %374 = vmatpush.xpose.msra.mxu0 0.0
    %375 = vmatpush.xpose.msra.mxu0 0.0
    %376 = vmatpush.xpose.msra.mxu0 0.0
    %377 = vmatpush.xpose.msra.mxu0 0.0
    %378 = vmatpush.xpose.msra.mxu0 0.0
    %379 = vmatpush.xpose.msra.mxu0 0.0
    %380 = vmatpush.xpose.msra.mxu0 0.0
    %381 = vmatpush.xpose.msra.mxu0 0.0
    %382 = vmatpush.xpose.msra.mxu0 %v366
    %383 = vmatpush.xpose.msra.mxu0 %v364
    %384 = vmatmul.f32.gmra.mxu0 %v360
    %v385 = vpop.f32.mrf.mxu0
    %v386 = vadd.f32 %v80, %v385
    %387 = vmatmul.f32.gmra.mxu0 %v362
    %v388 = vpop.f32.mrf.mxu0
    %v389 = vadd.f32 %v80, %v388
    %390 = vdwg.mxu0
    %v391 = vsel %vm294, %v386, -inf
    %392 = vmax.xlane.f32.xlu0 %v391
    %v393 = vpop.xlane.xlu0 %392
    %v394 = vsel %vm294, %v389, -inf
    %395 = vmax.xlane.f32.xlu0 %v394
    %v396 = vpop.xlane.xlu0 %395
    %v397 = vsub.f32 %v386, %v393
    %v398 = vsub.f32 %v389, %v396
    %v399 = vmul.f32 %v397, 1.442695
    %v400 = vpow.pop %v399
    %v401 = vmul.f32 %v398, 1.442695
    %v402 = vpow.pop %v401
    %v403 = vsel %vm294, %v400, 0.0
    %404 = vadd.xlane.f32.xlu0 %v403
    %v405 = vpop.xlane.xlu0 %404
    %v406 = vsel %vm294, %v402, 0.0
    %407 = vadd.xlane.f32.xlu0 %v406
    %v408 = vpop.xlane.xlu0 %407
    %v409 = vrcp.pop %v405
    %v410 = vrcp.pop %v408
    %v411 = vmul.f32 %v400, %v409
    %v412 = vmul.f32 %v402, %v410
    %413 = vrot.lane.b32.xlu0 %v247, 56
    %v414 = vpop.permute.xlu0 %413
    %415 = vrot.lane.b32.xlu0 %v249, 56
    %v416 = vpop.permute.xlu0 %415
    %v420 = vsel %vm294, %v411, 0
    %v423 = vsel %vm294, %v412, 0
    %425 = vmatpush.msra.mxu0 0.0
    %426 = vmatpush.msra.mxu0 0.0
    %427 = vmatpush.msra.mxu0 0.0
    %428 = vmatpush.msra.mxu0 0.0
    %429 = vmatpush.msra.mxu0 0.0
    %430 = vmatpush.msra.mxu0 0.0
    %431 = vmatpush.msra.mxu0 0.0
    %432 = vmatpush.msra.mxu0 0.0
    %433 = vmatpush.msra.mxu0 0.0
    %434 = vmatpush.msra.mxu0 0.0
    %435 = vmatpush.msra.mxu0 0.0
    %436 = vmatpush.msra.mxu0 0.0
    %437 = vmatpush.msra.mxu0 0.0
    %438 = vmatpush.msra.mxu0 0.0
    %439 = vmatpush.msra.mxu0 %v416
    %440 = vmatpush.msra.mxu0 %v414
    %441 = vmatmul.f32.gmra.mxu0 %v420
    %v442 = vpop.f32.mrf.mxu0
    %v443 = vadd.f32 0.0, %v442
    %444 = vmatmul.f32.gmra.mxu0 %v423
    %v445 = vpop.f32.mrf.mxu0
    %v446 = vadd.f32 0.0, %v445
    %447 = vdwg.mxu0
    %448 = vrot.lane.b32.xlu0 %v247, 112
    %v449 = vpop.permute.xlu0 %448
    %450 = vrot.lane.b32.xlu0 %v249, 112
    %v451 = vpop.permute.xlu0 %450
    %452 = vrot.lane.b32.xlu0 %v247, 80
    %v453 = vpop.permute.xlu0 %452
    %454 = vrot.lane.b32.xlu0 %v249, 80
    %v455 = vpop.permute.xlu0 %454
    %v456 = vsel %vm262, %v449, 0
    %v458 = vsel %vm262, %v451, 0
    %v460 = vsel %vm262, %v453, 0
    %v462 = vsel %vm262, %v455, 0
    %464 = vmatpush.xpose.msra.mxu0 0.0
    %465 = vmatpush.xpose.msra.mxu0 0.0
    %466 = vmatpush.xpose.msra.mxu0 0.0
    %467 = vmatpush.xpose.msra.mxu0 0.0
    %468 = vmatpush.xpose.msra.mxu0 0.0
    %469 = vmatpush.xpose.msra.mxu0 0.0
    %470 = vmatpush.xpose.msra.mxu0 0.0
    %471 = vmatpush.xpose.msra.mxu0 0.0
    %472 = vmatpush.xpose.msra.mxu0 0.0
    %473 = vmatpush.xpose.msra.mxu0 0.0
    %474 = vmatpush.xpose.msra.mxu0 0.0
    %475 = vmatpush.xpose.msra.mxu0 0.0
    %476 = vmatpush.xpose.msra.mxu0 0.0
    %477 = vmatpush.xpose.msra.mxu0 0.0
    %478 = vmatpush.xpose.msra.mxu0 %v462
    %479 = vmatpush.xpose.msra.mxu0 %v460
    %480 = vmatmul.f32.gmra.mxu0 %v456
    %v481 = vpop.f32.mrf.mxu0
    %v482 = vadd.f32 %v80, %v481
    %483 = vmatmul.f32.gmra.mxu0 %v458
    %v484 = vpop.f32.mrf.mxu0
    %v485 = vadd.f32 %v80, %v484
    %486 = vdwg.mxu0
    %v487 = vsel %vm294, %v482, -inf
    %488 = vmax.xlane.f32.xlu0 %v487
    %v489 = vpop.xlane.xlu0 %488
    %v490 = vsel %vm294, %v485, -inf
    %491 = vmax.xlane.f32.xlu0 %v490
    %v492 = vpop.xlane.xlu0 %491
    %v493 = vsub.f32 %v482, %v489
    %v494 = vsub.f32 %v485, %v492
    %v495 = vmul.f32 %v493, 1.442695
    %v496 = vpow.pop %v495
    %v497 = vmul.f32 %v494, 1.442695
    %v498 = vpow.pop %v497
    %v499 = vsel %vm294, %v496, 0.0
    %500 = vadd.xlane.f32.xlu0 %v499
    %v501 = vpop.xlane.xlu0 %500
    %v502 = vsel %vm294, %v498, 0.0
    %503 = vadd.xlane.f32.xlu0 %v502
    %v504 = vpop.xlane.xlu0 %503
    %v505 = vrcp.pop %v501
    %v506 = vrcp.pop %v504
    %v507 = vmul.f32 %v496, %v505
    %v508 = vmul.f32 %v498, %v506
    %509 = vrot.lane.b32.xlu0 %v247, 48
    %v510 = vpop.permute.xlu0 %509
    %511 = vrot.lane.b32.xlu0 %v249, 48
    %v512 = vpop.permute.xlu0 %511
    %v516 = vsel %vm294, %v507, 0
    %v519 = vsel %vm294, %v508, 0
    %521 = vmatpush.msra.mxu0 0.0
    %522 = vmatpush.msra.mxu0 0.0
    %523 = vmatpush.msra.mxu0 0.0
    %524 = vmatpush.msra.mxu0 0.0
    %525 = vmatpush.msra.mxu0 0.0
    %526 = vmatpush.msra.mxu0 0.0
    %527 = vmatpush.msra.mxu0 0.0
    %528 = vmatpush.msra.mxu0 0.0
    %529 = vmatpush.msra.mxu0 0.0
    %530 = vmatpush.msra.mxu0 0.0
    %531 = vmatpush.msra.mxu0 0.0
    %532 = vmatpush.msra.mxu0 0.0
    %533 = vmatpush.msra.mxu0 0.0
    %534 = vmatpush.msra.mxu0 0.0
    %535 = vmatpush.msra.mxu0 %v512
    %536 = vmatpush.msra.mxu0 %v510
    %537 = vmatmul.f32.gmra.mxu0 %v516
    %v538 = vpop.f32.mrf.mxu0
    %v539 = vadd.f32 0.0, %v538
    %540 = vmatmul.f32.gmra.mxu0 %v519
    %v541 = vpop.f32.mrf.mxu0
    %v542 = vadd.f32 0.0, %v541
    %543 = vdwg.mxu0
    %544 = vrot.lane.b32.xlu0 %v247, 104
    %v545 = vpop.permute.xlu0 %544
    %546 = vrot.lane.b32.xlu0 %v249, 104
    %v547 = vpop.permute.xlu0 %546
    %548 = vrot.lane.b32.xlu0 %v247, 72
    %v549 = vpop.permute.xlu0 %548
    %550 = vrot.lane.b32.xlu0 %v249, 72
    %v551 = vpop.permute.xlu0 %550
    %v552 = vsel %vm262, %v545, 0
    %v554 = vsel %vm262, %v547, 0
    %v556 = vsel %vm262, %v549, 0
    %v558 = vsel %vm262, %v551, 0
    %560 = vmatpush.xpose.msra.mxu0 0.0
    %561 = vmatpush.xpose.msra.mxu0 0.0
    %562 = vmatpush.xpose.msra.mxu0 0.0
    %563 = vmatpush.xpose.msra.mxu0 0.0
    %564 = vmatpush.xpose.msra.mxu0 0.0
    %565 = vmatpush.xpose.msra.mxu0 0.0
    %566 = vmatpush.xpose.msra.mxu0 0.0
    %567 = vmatpush.xpose.msra.mxu0 0.0
    %568 = vmatpush.xpose.msra.mxu0 0.0
    %569 = vmatpush.xpose.msra.mxu0 0.0
    %570 = vmatpush.xpose.msra.mxu0 0.0
    %571 = vmatpush.xpose.msra.mxu0 0.0
    %572 = vmatpush.xpose.msra.mxu0 0.0
    %573 = vmatpush.xpose.msra.mxu0 0.0
    %574 = vmatpush.xpose.msra.mxu0 %v558
    %575 = vmatpush.xpose.msra.mxu0 %v556
    %576 = vmatmul.f32.gmra.mxu0 %v552
    %v577 = vpop.f32.mrf.mxu0
    %v578 = vadd.f32 %v80, %v577
    %579 = vmatmul.f32.gmra.mxu0 %v554
    %v580 = vpop.f32.mrf.mxu0
    %v581 = vadd.f32 %v80, %v580
    %582 = vdwg.mxu0
    %v583 = vsel %vm294, %v578, -inf
    %584 = vmax.xlane.f32.xlu0 %v583
    %v585 = vpop.xlane.xlu0 %584
    %v586 = vsel %vm294, %v581, -inf
    %587 = vmax.xlane.f32.xlu0 %v586
    %v588 = vpop.xlane.xlu0 %587
    %v589 = vsub.f32 %v578, %v585
    %v590 = vsub.f32 %v581, %v588
    %v591 = vmul.f32 %v589, 1.442695
    %v592 = vpow.pop %v591
    %v593 = vmul.f32 %v590, 1.442695
    %v594 = vpow.pop %v593
    %v595 = vsel %vm294, %v592, 0.0
    %596 = vadd.xlane.f32.xlu0 %v595
    %v597 = vpop.xlane.xlu0 %596
    %v598 = vsel %vm294, %v594, 0.0
    %599 = vadd.xlane.f32.xlu0 %v598
    %v600 = vpop.xlane.xlu0 %599
    %v601 = vrcp.pop %v597
    %v602 = vrcp.pop %v600
    %v603 = vmul.f32 %v592, %v601
    %v604 = vmul.f32 %v594, %v602
    %605 = vrot.lane.b32.xlu0 %v247, 40
    %v606 = vpop.permute.xlu0 %605
    %607 = vrot.lane.b32.xlu0 %v249, 40
    %v608 = vpop.permute.xlu0 %607
    %v612 = vsel %vm294, %v603, 0
    %v615 = vsel %vm294, %v604, 0
    %617 = vmatpush.msra.mxu0 0.0
    %618 = vmatpush.msra.mxu0 0.0
    %619 = vmatpush.msra.mxu0 0.0
    %620 = vmatpush.msra.mxu0 0.0
    %621 = vmatpush.msra.mxu0 0.0
    %622 = vmatpush.msra.mxu0 0.0
    %623 = vmatpush.msra.mxu0 0.0
    %624 = vmatpush.msra.mxu0 0.0
    %625 = vmatpush.msra.mxu0 0.0
    %626 = vmatpush.msra.mxu0 0.0
    %627 = vmatpush.msra.mxu0 0.0
    %628 = vmatpush.msra.mxu0 0.0
    %629 = vmatpush.msra.mxu0 0.0
    %630 = vmatpush.msra.mxu0 0.0
    %631 = vmatpush.msra.mxu0 %v608
    %632 = vmatpush.msra.mxu0 %v606
    %633 = vmatmul.f32.gmra.mxu0 %v612
    %v634 = vpop.f32.mrf.mxu0
    %v635 = vadd.f32 0.0, %v634
    %636 = vmatmul.f32.gmra.mxu0 %v615
    %v637 = vpop.f32.mrf.mxu0
    %v638 = vadd.f32 0.0, %v637
    %639 = vdwg.mxu0
    %642 = vrot.lane.b32.xlu0 %v443, 8
    %v643 = vpop.permute.xlu0 %642
    %644 = vrot.lane.b32.xlu0 %v446, 8
    %v645 = vpop.permute.xlu0 %644
    %650 = vrot.lane.b32.xlu0 %v539, 16
    %v651 = vpop.permute.xlu0 %650
    %652 = vrot.lane.b32.xlu0 %v542, 16
    %v653 = vpop.permute.xlu0 %652
    %658 = vrot.lane.b32.xlu0 %v635, 24
    %v659 = vpop.permute.xlu0 %658
    %660 = vrot.lane.b32.xlu0 %v638, 24
    %v661 = vpop.permute.xlu0 %660
    %v664 = vsel %vm262, %v347, %v643
    %v665 = vsel %vm262, %v350, %v645
    %v666 = vsel %vm294, %v664, %v651
    %v667 = vsel %vm294, %v665, %v653
    %vm668 = vcmask 195584
    %v669 = vsel %vm668, %v666, %v659
    %v670 = vsel %vm668, %v667, %v661
    %673 = vrot.lane.b32.xlu0 %v252, 96
    %v674 = vpop.permute.xlu0 %673
    %675 = vrot.lane.b32.xlu0 %v254, 96
    %v676 = vpop.permute.xlu0 %675
    %v677 = vsel %vm262, %v252, 0
    %v679 = vsel %vm262, %v254, 0
    %v681 = vsel %vm262, %v674, 0
    %v683 = vsel %vm262, %v676, 0
    %685 = vmatpush.xpose.msra.mxu0 0.0
    %686 = vmatpush.xpose.msra.mxu0 0.0
    %687 = vmatpush.xpose.msra.mxu0 0.0
    %688 = vmatpush.xpose.msra.mxu0 0.0
    %689 = vmatpush.xpose.msra.mxu0 0.0
    %690 = vmatpush.xpose.msra.mxu0 0.0
    %691 = vmatpush.xpose.msra.mxu0 0.0
    %692 = vmatpush.xpose.msra.mxu0 0.0
    %693 = vmatpush.xpose.msra.mxu0 0.0
    %694 = vmatpush.xpose.msra.mxu0 0.0
    %695 = vmatpush.xpose.msra.mxu0 0.0
    %696 = vmatpush.xpose.msra.mxu0 0.0
    %697 = vmatpush.xpose.msra.mxu0 0.0
    %698 = vmatpush.xpose.msra.mxu0 0.0
    %699 = vmatpush.xpose.msra.mxu0 %v683
    %700 = vmatpush.xpose.msra.mxu0 %v681
    %701 = vmatmul.f32.gmra.mxu0 %v677
    %v702 = vpop.f32.mrf.mxu0
    %v703 = vadd.f32 %v80, %v702
    %704 = vmatmul.f32.gmra.mxu0 %v679
    %v705 = vpop.f32.mrf.mxu0
    %v706 = vadd.f32 %v80, %v705
    %707 = vdwg.mxu0
    %v708 = vsel %vm294, %v703, -inf
    %709 = vmax.xlane.f32.xlu0 %v708
    %v710 = vpop.xlane.xlu0 %709
    %v711 = vsel %vm294, %v706, -inf
    %712 = vmax.xlane.f32.xlu0 %v711
    %v713 = vpop.xlane.xlu0 %712
    %v714 = vsub.f32 %v703, %v710
    %v715 = vsub.f32 %v706, %v713
    %v716 = vmul.f32 %v714, 1.442695
    %v717 = vpow.pop %v716
    %v718 = vmul.f32 %v715, 1.442695
    %v719 = vpow.pop %v718
    %v720 = vsel %vm294, %v717, 0.0
    %721 = vadd.xlane.f32.xlu0 %v720
    %v722 = vpop.xlane.xlu0 %721
    %v723 = vsel %vm294, %v719, 0.0
    %724 = vadd.xlane.f32.xlu0 %v723
    %v725 = vpop.xlane.xlu0 %724
    %v726 = vrcp.pop %v722
    %v727 = vrcp.pop %v725
    %v728 = vmul.f32 %v717, %v726
    %v729 = vmul.f32 %v719, %v727
    %730 = vrot.lane.b32.xlu0 %v252, 64
    %v731 = vpop.permute.xlu0 %730
    %732 = vrot.lane.b32.xlu0 %v254, 64
    %v733 = vpop.permute.xlu0 %732
    %v737 = vsel %vm294, %v728, 0
    %v740 = vsel %vm294, %v729, 0
    %742 = vmatpush.msra.mxu0 0.0
    %743 = vmatpush.msra.mxu0 0.0
    %744 = vmatpush.msra.mxu0 0.0
    %745 = vmatpush.msra.mxu0 0.0
    %746 = vmatpush.msra.mxu0 0.0
    %747 = vmatpush.msra.mxu0 0.0
    %748 = vmatpush.msra.mxu0 0.0
    %749 = vmatpush.msra.mxu0 0.0
    %750 = vmatpush.msra.mxu0 0.0
    %751 = vmatpush.msra.mxu0 0.0
    %752 = vmatpush.msra.mxu0 0.0
    %753 = vmatpush.msra.mxu0 0.0
    %754 = vmatpush.msra.mxu0 0.0
    %755 = vmatpush.msra.mxu0 0.0
    %756 = vmatpush.msra.mxu0 %v733
    %757 = vmatpush.msra.mxu0 %v731
    %758 = vmatmul.f32.gmra.mxu0 %v737
    %v759 = vpop.f32.mrf.mxu0
    %v760 = vadd.f32 0.0, %v759
    %761 = vmatmul.f32.gmra.mxu0 %v740
    %v762 = vpop.f32.mrf.mxu0
    %v763 = vadd.f32 0.0, %v762
    %764 = vdwg.mxu0
    %765 = vrot.lane.b32.xlu0 %v252, 120
    %v766 = vpop.permute.xlu0 %765
    %767 = vrot.lane.b32.xlu0 %v254, 120
    %v768 = vpop.permute.xlu0 %767
    %769 = vrot.lane.b32.xlu0 %v252, 88
    %v770 = vpop.permute.xlu0 %769
    %771 = vrot.lane.b32.xlu0 %v254, 88
    %v772 = vpop.permute.xlu0 %771
    %v773 = vsel %vm262, %v766, 0
    %v775 = vsel %vm262, %v768, 0
    %v777 = vsel %vm262, %v770, 0
    %v779 = vsel %vm262, %v772, 0
    %781 = vmatpush.xpose.msra.mxu0 0.0
    %782 = vmatpush.xpose.msra.mxu0 0.0
    %783 = vmatpush.xpose.msra.mxu0 0.0
    %784 = vmatpush.xpose.msra.mxu0 0.0
    %785 = vmatpush.xpose.msra.mxu0 0.0
    %786 = vmatpush.xpose.msra.mxu0 0.0
    %787 = vmatpush.xpose.msra.mxu0 0.0
    %788 = vmatpush.xpose.msra.mxu0 0.0
    %789 = vmatpush.xpose.msra.mxu0 0.0
    %790 = vmatpush.xpose.msra.mxu0 0.0
    %791 = vmatpush.xpose.msra.mxu0 0.0
    %792 = vmatpush.xpose.msra.mxu0 0.0
    %793 = vmatpush.xpose.msra.mxu0 0.0
    %794 = vmatpush.xpose.msra.mxu0 0.0
    %795 = vmatpush.xpose.msra.mxu0 %v779
    %796 = vmatpush.xpose.msra.mxu0 %v777
    %797 = vmatmul.f32.gmra.mxu0 %v773
    %v798 = vpop.f32.mrf.mxu0
    %v799 = vadd.f32 %v80, %v798
    %800 = vmatmul.f32.gmra.mxu0 %v775
    %v801 = vpop.f32.mrf.mxu0
    %v802 = vadd.f32 %v80, %v801
    %803 = vdwg.mxu0
    %v804 = vsel %vm294, %v799, -inf
    %805 = vmax.xlane.f32.xlu0 %v804
    %v806 = vpop.xlane.xlu0 %805
    %v807 = vsel %vm294, %v802, -inf
    %808 = vmax.xlane.f32.xlu0 %v807
    %v809 = vpop.xlane.xlu0 %808
    %v810 = vsub.f32 %v799, %v806
    %v811 = vsub.f32 %v802, %v809
    %v812 = vmul.f32 %v810, 1.442695
    %v813 = vpow.pop %v812
    %v814 = vmul.f32 %v811, 1.442695
    %v815 = vpow.pop %v814
    %v816 = vsel %vm294, %v813, 0.0
    %817 = vadd.xlane.f32.xlu0 %v816
    %v818 = vpop.xlane.xlu0 %817
    %v819 = vsel %vm294, %v815, 0.0
    %820 = vadd.xlane.f32.xlu0 %v819
    %v821 = vpop.xlane.xlu0 %820
    %v822 = vrcp.pop %v818
    %v823 = vrcp.pop %v821
    %v824 = vmul.f32 %v813, %v822
    %v825 = vmul.f32 %v815, %v823
    %826 = vrot.lane.b32.xlu0 %v252, 56
    %v827 = vpop.permute.xlu0 %826
    %828 = vrot.lane.b32.xlu0 %v254, 56
    %v829 = vpop.permute.xlu0 %828
    %v833 = vsel %vm294, %v824, 0
    %v836 = vsel %vm294, %v825, 0
    %838 = vmatpush.msra.mxu0 0.0
    %839 = vmatpush.msra.mxu0 0.0
    %840 = vmatpush.msra.mxu0 0.0
    %841 = vmatpush.msra.mxu0 0.0
    %842 = vmatpush.msra.mxu0 0.0
    %843 = vmatpush.msra.mxu0 0.0
    %844 = vmatpush.msra.mxu0 0.0
    %845 = vmatpush.msra.mxu0 0.0
    %846 = vmatpush.msra.mxu0 0.0
    %847 = vmatpush.msra.mxu0 0.0
    %848 = vmatpush.msra.mxu0 0.0
    %849 = vmatpush.msra.mxu0 0.0
    %850 = vmatpush.msra.mxu0 0.0
    %851 = vmatpush.msra.mxu0 0.0
    %852 = vmatpush.msra.mxu0 %v829
    %853 = vmatpush.msra.mxu0 %v827
    %854 = vmatmul.f32.gmra.mxu0 %v833
    %v855 = vpop.f32.mrf.mxu0
    %v856 = vadd.f32 0.0, %v855
    %857 = vmatmul.f32.gmra.mxu0 %v836
    %v858 = vpop.f32.mrf.mxu0
    %v859 = vadd.f32 0.0, %v858
    %860 = vdwg.mxu0
    %861 = vrot.lane.b32.xlu0 %v252, 112
    %v862 = vpop.permute.xlu0 %861
    %863 = vrot.lane.b32.xlu0 %v254, 112
    %v864 = vpop.permute.xlu0 %863
    %865 = vrot.lane.b32.xlu0 %v252, 80
    %v866 = vpop.permute.xlu0 %865
    %867 = vrot.lane.b32.xlu0 %v254, 80
    %v868 = vpop.permute.xlu0 %867
    %v869 = vsel %vm262, %v862, 0
    %v871 = vsel %vm262, %v864, 0
    %v873 = vsel %vm262, %v866, 0
    %v875 = vsel %vm262, %v868, 0
    %877 = vmatpush.xpose.msra.mxu0 0.0
    %878 = vmatpush.xpose.msra.mxu0 0.0
    %879 = vmatpush.xpose.msra.mxu0 0.0
    %880 = vmatpush.xpose.msra.mxu0 0.0
    %881 = vmatpush.xpose.msra.mxu0 0.0
    %882 = vmatpush.xpose.msra.mxu0 0.0
    %883 = vmatpush.xpose.msra.mxu0 0.0
    %884 = vmatpush.xpose.msra.mxu0 0.0
    %885 = vmatpush.xpose.msra.mxu0 0.0
    %886 = vmatpush.xpose.msra.mxu0 0.0
    %887 = vmatpush.xpose.msra.mxu0 0.0
    %888 = vmatpush.xpose.msra.mxu0 0.0
    %889 = vmatpush.xpose.msra.mxu0 0.0
    %890 = vmatpush.xpose.msra.mxu0 0.0
    %891 = vmatpush.xpose.msra.mxu0 %v875
    %892 = vmatpush.xpose.msra.mxu0 %v873
    %893 = vmatmul.f32.gmra.mxu0 %v869
    %v894 = vpop.f32.mrf.mxu0
    %v895 = vadd.f32 %v80, %v894
    %896 = vmatmul.f32.gmra.mxu0 %v871
    %v897 = vpop.f32.mrf.mxu0
    %v898 = vadd.f32 %v80, %v897
    %899 = vdwg.mxu0
    %v900 = vsel %vm294, %v895, -inf
    %901 = vmax.xlane.f32.xlu0 %v900
    %v902 = vpop.xlane.xlu0 %901
    %v903 = vsel %vm294, %v898, -inf
    %904 = vmax.xlane.f32.xlu0 %v903
    %v905 = vpop.xlane.xlu0 %904
    %v906 = vsub.f32 %v895, %v902
    %v907 = vsub.f32 %v898, %v905
    %v908 = vmul.f32 %v906, 1.442695
    %v909 = vpow.pop %v908
    %v910 = vmul.f32 %v907, 1.442695
    %v911 = vpow.pop %v910
    %v912 = vsel %vm294, %v909, 0.0
    %913 = vadd.xlane.f32.xlu0 %v912
    %v914 = vpop.xlane.xlu0 %913
    %v915 = vsel %vm294, %v911, 0.0
    %916 = vadd.xlane.f32.xlu0 %v915
    %v917 = vpop.xlane.xlu0 %916
    %v918 = vrcp.pop %v914
    %v919 = vrcp.pop %v917
    %v920 = vmul.f32 %v909, %v918
    %v921 = vmul.f32 %v911, %v919
    %922 = vrot.lane.b32.xlu0 %v252, 48
    %v923 = vpop.permute.xlu0 %922
    %924 = vrot.lane.b32.xlu0 %v254, 48
    %v925 = vpop.permute.xlu0 %924
    %v929 = vsel %vm294, %v920, 0
    %v932 = vsel %vm294, %v921, 0
    %934 = vmatpush.msra.mxu0 0.0
    %935 = vmatpush.msra.mxu0 0.0
    %936 = vmatpush.msra.mxu0 0.0
    %937 = vmatpush.msra.mxu0 0.0
    %938 = vmatpush.msra.mxu0 0.0
    %939 = vmatpush.msra.mxu0 0.0
    %940 = vmatpush.msra.mxu0 0.0
    %941 = vmatpush.msra.mxu0 0.0
    %942 = vmatpush.msra.mxu0 0.0
    %943 = vmatpush.msra.mxu0 0.0
    %944 = vmatpush.msra.mxu0 0.0
    %945 = vmatpush.msra.mxu0 0.0
    %946 = vmatpush.msra.mxu0 0.0
    %947 = vmatpush.msra.mxu0 0.0
    %948 = vmatpush.msra.mxu0 %v925
    %949 = vmatpush.msra.mxu0 %v923
    %950 = vmatmul.f32.gmra.mxu0 %v929
    %v951 = vpop.f32.mrf.mxu0
    %v952 = vadd.f32 0.0, %v951
    %953 = vmatmul.f32.gmra.mxu0 %v932
    %v954 = vpop.f32.mrf.mxu0
    %v955 = vadd.f32 0.0, %v954
    %956 = vdwg.mxu0
    %957 = vrot.lane.b32.xlu0 %v252, 104
    %v958 = vpop.permute.xlu0 %957
    %959 = vrot.lane.b32.xlu0 %v254, 104
    %v960 = vpop.permute.xlu0 %959
    %961 = vrot.lane.b32.xlu0 %v252, 72
    %v962 = vpop.permute.xlu0 %961
    %963 = vrot.lane.b32.xlu0 %v254, 72
    %v964 = vpop.permute.xlu0 %963
    %v965 = vsel %vm262, %v958, 0
    %v967 = vsel %vm262, %v960, 0
    %v969 = vsel %vm262, %v962, 0
    %v971 = vsel %vm262, %v964, 0
    %973 = vmatpush.xpose.msra.mxu0 0.0
    %974 = vmatpush.xpose.msra.mxu0 0.0
    %975 = vmatpush.xpose.msra.mxu0 0.0
    %976 = vmatpush.xpose.msra.mxu0 0.0
    %977 = vmatpush.xpose.msra.mxu0 0.0
    %978 = vmatpush.xpose.msra.mxu0 0.0
    %979 = vmatpush.xpose.msra.mxu0 0.0
    %980 = vmatpush.xpose.msra.mxu0 0.0
    %981 = vmatpush.xpose.msra.mxu0 0.0
    %982 = vmatpush.xpose.msra.mxu0 0.0
    %983 = vmatpush.xpose.msra.mxu0 0.0
    %984 = vmatpush.xpose.msra.mxu0 0.0
    %985 = vmatpush.xpose.msra.mxu0 0.0
    %986 = vmatpush.xpose.msra.mxu0 0.0
    %987 = vmatpush.xpose.msra.mxu0 %v971
    %988 = vmatpush.xpose.msra.mxu0 %v969
    %989 = vmatmul.f32.gmra.mxu0 %v965
    %v990 = vpop.f32.mrf.mxu0
    %v991 = vadd.f32 %v80, %v990
    %992 = vmatmul.f32.gmra.mxu0 %v967
    %v993 = vpop.f32.mrf.mxu0
    %v994 = vadd.f32 %v80, %v993
    %995 = vdwg.mxu0
    %v996 = vsel %vm294, %v991, -inf
    %997 = vmax.xlane.f32.xlu0 %v996
    %v998 = vpop.xlane.xlu0 %997
    %v999 = vsel %vm294, %v994, -inf
    %1000 = vmax.xlane.f32.xlu0 %v999
    %v1001 = vpop.xlane.xlu0 %1000
    %v1002 = vsub.f32 %v991, %v998
    %v1003 = vsub.f32 %v994, %v1001
    %v1004 = vmul.f32 %v1002, 1.442695
    %v1005 = vpow.pop %v1004
    %v1006 = vmul.f32 %v1003, 1.442695
    %v1007 = vpow.pop %v1006
    %v1008 = vsel %vm294, %v1005, 0.0
    %1009 = vadd.xlane.f32.xlu0 %v1008
    %v1010 = vpop.xlane.xlu0 %1009
    %v1011 = vsel %vm294, %v1007, 0.0
    %1012 = vadd.xlane.f32.xlu0 %v1011
    %v1013 = vpop.xlane.xlu0 %1012
    %v1014 = vrcp.pop %v1010
    %v1015 = vrcp.pop %v1013
    %v1016 = vmul.f32 %v1005, %v1014
    %v1017 = vmul.f32 %v1007, %v1015
    %1018 = vrot.lane.b32.xlu0 %v252, 40
    %v1019 = vpop.permute.xlu0 %1018
    %1020 = vrot.lane.b32.xlu0 %v254, 40
    %v1021 = vpop.permute.xlu0 %1020
    %v1025 = vsel %vm294, %v1016, 0
    %v1028 = vsel %vm294, %v1017, 0
    %1030 = vmatpush.msra.mxu0 0.0
    %1031 = vmatpush.msra.mxu0 0.0
    %1032 = vmatpush.msra.mxu0 0.0
    %1033 = vmatpush.msra.mxu0 0.0
    %1034 = vmatpush.msra.mxu0 0.0
    %1035 = vmatpush.msra.mxu0 0.0
    %1036 = vmatpush.msra.mxu0 0.0
    %1037 = vmatpush.msra.mxu0 0.0
    %1038 = vmatpush.msra.mxu0 0.0
    %1039 = vmatpush.msra.mxu0 0.0
    %1040 = vmatpush.msra.mxu0 0.0
    %1041 = vmatpush.msra.mxu0 0.0
    %1042 = vmatpush.msra.mxu0 0.0
    %1043 = vmatpush.msra.mxu0 0.0
    %1044 = vmatpush.msra.mxu0 %v1021
    %1045 = vmatpush.msra.mxu0 %v1019
    %1046 = vmatmul.f32.gmra.mxu0 %v1025
    %v1047 = vpop.f32.mrf.mxu0
    %v1048 = vadd.f32 0.0, %v1047
    %1049 = vmatmul.f32.gmra.mxu0 %v1028
    %v1050 = vpop.f32.mrf.mxu0
    %v1051 = vadd.f32 0.0, %v1050
    %1052 = vdwg.mxu0
    %1055 = vrot.lane.b32.xlu0 %v856, 8
    %v1056 = vpop.permute.xlu0 %1055
    %1057 = vrot.lane.b32.xlu0 %v859, 8
    %v1058 = vpop.permute.xlu0 %1057
    %1063 = vrot.lane.b32.xlu0 %v952, 16
    %v1064 = vpop.permute.xlu0 %1063
    %1065 = vrot.lane.b32.xlu0 %v955, 16
    %v1066 = vpop.permute.xlu0 %1065
    %1071 = vrot.lane.b32.xlu0 %v1048, 24
    %v1072 = vpop.permute.xlu0 %1071
    %1073 = vrot.lane.b32.xlu0 %v1051, 24
    %v1074 = vpop.permute.xlu0 %1073
    %v1077 = vsel %vm262, %v760, %v1056
    %v1078 = vsel %vm262, %v763, %v1058
    %v1079 = vsel %vm294, %v1077, %v1064
    %v1080 = vsel %vm294, %v1078, %v1066
    %v1081 = vsel %vm668, %v1079, %v1072
    %v1082 = vsel %vm668, %v1080, %v1074
    %v1083 = vld [vmem:[#allocation4] sm:$0xf]
    %v1084 = vld [vmem:[#allocation4 + $0x4] sm:$0xf]
    %v1085 = vld [vmem:[#allocation4 + $0x8] sm:$0xf]
    %v1086 = vld [vmem:[#allocation4 + $0xc] sm:$0xf]
    %v1087 = vpack.c.bf16 %v670, %v669
    %v1088 = vpack.c.bf16 %v1082, %v1081
    %v1089 = vld [vmem:[%s6] sm:$0x1]
    %v1091 = vperm.slane %v1089, 0
    %v1097 = vunpack.c.l.b16 %v1083
    %v1098 = vunpack.c.l.b16 %v1084
    %v1099 = vunpack.c.l.b16 %v1085
    %v1100 = vunpack.c.l.b16 %v1086
    %v1101 = vpack.c.b16 %v1098, %v1097
    %v1102 = vpack.c.b16 %v1100, %v1099
    %v1106 = vsel %vm103, %v1087, 0
    %v1109 = vsel %vm103, %v1088, 0
    %1111 = vmatpush.bf16.msra.mxu0 0
    %1112 = vmatpush.bf16.msra.mxu0 0
    %1113 = vmatpush.bf16.msra.mxu0 0
    %1114 = vmatpush.bf16.msra.mxu0 0
    %1115 = vmatpush.bf16.msra.mxu0 0
    %1116 = vmatpush.bf16.msra.mxu0 0
    %1117 = vmatpush.bf16.msra.mxu0 %v1102
    %1118 = vmatpush.bf16.msra.mxu0 %v1101
    %1119 = vmatmul.bf16.gmra.mxu0 %v1106
    %v1120 = vpop.f32.mrf.mxu0
    %v1121 = vadd.f32 %v1091, %v1120
    %v1122 = vpop.f32.mrf.mxu0
    %v1123 = vadd.f32 %v1091, %v1122
    %1124 = vmatmul.bf16.gmra.mxu0 %v1109
    %v1125 = vpop.f32.mrf.mxu0
    %v1126 = vadd.f32 %v1091, %v1125
    %v1127 = vpop.f32.mrf.mxu0
    %v1128 = vadd.f32 %v1091, %v1127
    %1129 = vdwg.mxu0
    %v1130 = vadd.f32 %v1121, %v120
    %v1131 = vadd.f32 %v1123, %v122
    %v1132 = vadd.f32 %v1126, %v125
    %v1133 = vadd.f32 %v1128, %v127
    %v1134 = vld [vmem:[#allocation6] sm:$0xf]
    %v1135 = vld [vmem:[#allocation6 + $0x4] sm:$0xf]
    %v1136 = vld [vmem:[#allocation6 + $0x8] sm:$0xf]
    %v1137 = vld [vmem:[#allocation6 + $0xc] sm:$0xf]
    %v1138 = vpack.c.bf16 %v1131, %v1130
    %v1139 = vpack.c.bf16 %v1133, %v1132
    %v1144 = vunpack.c.l.b16 %v1134
    %v1145 = vunpack.c.l.b16 %v1135
    %v1146 = vunpack.c.l.b16 %v1136
    %v1147 = vunpack.c.l.b16 %v1137
    %v1148 = vpack.c.b16 %v1145, %v1144
    %v1149 = vpack.c.b16 %v1147, %v1146
    %v1153 = vsel %vm103, %v1138, 0
    %v1156 = vsel %vm103, %v1139, 0
    %1158 = vmatpush.bf16.msra.mxu0 0
    %1159 = vmatpush.bf16.msra.mxu0 0
    %1160 = vmatpush.bf16.msra.mxu0 0
    %1161 = vmatpush.bf16.msra.mxu0 0
    %1162 = vmatpush.bf16.msra.mxu0 0
    %1163 = vmatpush.bf16.msra.mxu0 0
    %1164 = vmatpush.bf16.msra.mxu0 %v1149
    %1165 = vmatpush.bf16.msra.mxu0 %v1148
    %1166 = vmatmul.bf16.gmra.mxu0 %v1153
    %v1167 = vpop.f32.mrf.mxu0
    %v1168 = vadd.f32 0.0, %v1167
    %v1169 = vpop.f32.mrf.mxu0
    %v1170 = vadd.f32 0.0, %v1169
    %1171 = vmatmul.bf16.gmra.mxu0 %v1156
    %v1172 = vpop.f32.mrf.mxu0
    %v1173 = vadd.f32 0.0, %v1172
    %v1174 = vpop.f32.mrf.mxu0
    %v1175 = vadd.f32 0.0, %v1174
    %1176 = vdwg.mxu0
    %v1177 = vmax.f32 %v1168, 0.0
    %v1178 = vmax.f32 %v1170, 0.0
    %v1179 = vmax.f32 %v1173, 0.0
    %v1180 = vmax.f32 %v1175, 0.0
    %v1181 = vadd.f32 %v1177, %v1130
    %v1182 = vadd.f32 %v1178, %v1131
    %v1183 = vadd.f32 %v1179, %v1132
    %v1184 = vadd.f32 %v1180, %v1133
    %s1185 = scalar_lea.vmem [#allocation6], 16
    %v1186 = vld [vmem:[%s1185] sm:$0xf]
    %v1187 = vld [vmem:[%s1185 + $0x4] sm:$0xf]
    %v1188 = vld [vmem:[%s1185 + $0x8] sm:$0xf]
    %v1189 = vld [vmem:[%s1185 + $0xc] sm:$0xf]
    %v1190 = vpack.c.bf16 %v1182, %v1181
    %v1191 = vpack.c.bf16 %v1184, %v1183
    %v1196 = vunpack.c.l.b16 %v1186
    %v1197 = vunpack.c.l.b16 %v1187
    %v1198 = vunpack.c.l.b16 %v1188
    %v1199 = vunpack.c.l.b16 %v1189
    %v1200 = vpack.c.b16 %v1197, %v1196
    %v1201 = vpack.c.b16 %v1199, %v1198
    %v1205 = vsel %vm103, %v1190, 0
    %v1208 = vsel %vm103, %v1191, 0
    %1210 = vmatpush.bf16.msra.mxu0 0
    %1211 = vmatpush.bf16.msra.mxu0 0
    %1212 = vmatpush.bf16.msra.mxu0 0
    %1213 = vmatpush.bf16.msra.mxu0 0
    %1214 = vmatpush.bf16.msra.mxu0 0
    %1215 = vmatpush.bf16.msra.mxu0 0
    %1216 = vmatpush.bf16.msra.mxu0 %v1201
    %1217 = vmatpush.bf16.msra.mxu0 %v1200
    %1218 = vmatmul.bf16.gmra.mxu0 %v1205
    %v1219 = vpop.f32.mrf.mxu0
    %v1220 = vadd.f32 0.0, %v1219
    %v1221 = vpop.f32.mrf.mxu0
    %v1222 = vadd.f32 0.0, %v1221
    %1223 = vmatmul.bf16.gmra.mxu0 %v1208
    %v1224 = vpop.f32.mrf.mxu0
    %v1225 = vadd.f32 0.0, %v1224
    %v1226 = vpop.f32.mrf.mxu0
    %v1227 = vadd.f32 0.0, %v1226
    %1228 = vdwg.mxu0
    %v1229 = vmax.f32 %v1220, 0.0
    %v1230 = vmax.f32 %v1222, 0.0
    %v1231 = vmax.f32 %v1225, 0.0
    %v1232 = vmax.f32 %v1227, 0.0
    %v1233 = vadd.f32 %v1229, %v1130
    %v1234 = vadd.f32 %v1230, %v1131
    %v1235 = vadd.f32 %v1231, %v1132
    %v1236 = vadd.f32 %v1232, %v1133
    %s1237 = scalar_lea.vmem %s2, 16
    %v1238 = vld [vmem:[%s1237] sm:$0xf]
    %v1239 = vld [vmem:[%s1237 + $0x4] sm:$0xf]
    %v1240 = vld [vmem:[%s1237 + $0x8] sm:$0xf]
    %v1241 = vld [vmem:[%s1237 + $0xc] sm:$0xf]
    %v1242 = vpack.c.bf16 %v1234, %v1233
    %v1243 = vpack.c.bf16 %v1236, %v1235
    %v1248 = vunpack.c.l.b16 %v1238
    %v1249 = vunpack.c.l.b16 %v1239
    %v1250 = vunpack.c.l.b16 %v1240
    %v1251 = vunpack.c.l.b16 %v1241
    %v1252 = vpack.c.b16 %v1249, %v1248
    %v1253 = vpack.c.b16 %v1251, %v1250
    %v1257 = vsel %vm103, %v1242, 0
    %v1260 = vsel %vm103, %v1243, 0
    %1262 = vmatpush.bf16.msra.mxu0 0
    %1263 = vmatpush.bf16.msra.mxu0 0
    %1264 = vmatpush.bf16.msra.mxu0 0
    %1265 = vmatpush.bf16.msra.mxu0 0
    %1266 = vmatpush.bf16.msra.mxu0 0
    %1267 = vmatpush.bf16.msra.mxu0 0
    %1268 = vmatpush.bf16.msra.mxu0 %v1253
    %1269 = vmatpush.bf16.msra.mxu0 %v1252
    %1270 = vmatmul.bf16.gmra.mxu0 %v1257
    %v1271 = vpop.f32.mrf.mxu0
    %v1272 = vadd.f32 0.0, %v1271
    %v1273 = vpop.f32.mrf.mxu0
    %v1274 = vadd.f32 0.0, %v1273
    %1275 = vmatmul.bf16.gmra.mxu0 %v1260
    %v1276 = vpop.f32.mrf.mxu0
    %v1277 = vadd.f32 0.0, %v1276
    %v1278 = vpop.f32.mrf.mxu0
    %v1279 = vadd.f32 0.0, %v1278
    %1280 = vdwg.mxu0
    %v1281 = vmax.f32 %v1272, 0.0
    %v1282 = vmax.f32 %v1274, 0.0
    %v1283 = vmax.f32 %v1277, 0.0
    %v1284 = vmax.f32 %v1279, 0.0
    %s1285 = scalar_lea.vmem [#allocation2], 48
    %v1286 = vld [vmem:[%s1285] sm:$0xf]
    %v1287 = vld [vmem:[%s1285 + $0x4] sm:$0xf]
    %v1288 = vld [vmem:[%s1285 + $0x8] sm:$0xf]
    %v1289 = vld [vmem:[%s1285 + $0xc] sm:$0xf]
    %v1290 = vld [vmem:[%s1285 + $0x10] sm:$0xf]
    %v1291 = vld [vmem:[%s1285 + $0x14] sm:$0xf]
    %v1292 = vld [vmem:[%s1285 + $0x18] sm:$0xf]
    %v1293 = vld [vmem:[%s1285 + $0x1c] sm:$0xf]
    %v1294 = vld [vmem:[%s1285 + $0x20] sm:$0xf]
    %v1295 = vld [vmem:[%s1285 + $0x24] sm:$0xf]
    %v1296 = vld [vmem:[%s1285 + $0x28] sm:$0xf]
    %v1297 = vld [vmem:[%s1285 + $0x2c] sm:$0xf]
    %v1298 = vpack.c.bf16 %v1282, %v1281
    %v1299 = vpack.c.bf16 %v1284, %v1283
    %s1300 = scalar_lea.vmem %s4, 1
    %v1301 = vld [vmem:[%s1300] sm:$0x1]
    %v1303 = vperm.slane %v1301, 0
    %v1317 = vunpack.c.l.b16 %v1286
    %v1318 = vunpack.c.l.b16 %v1287
    %v1319 = vunpack.c.l.b16 %v1288
    %v1320 = vunpack.c.l.b16 %v1289
    %v1321 = vunpack.c.l.b16 %v1290
    %v1322 = vunpack.c.l.b16 %v1291
    %v1323 = vunpack.c.l.b16 %v1292
    %v1324 = vunpack.c.l.b16 %v1293
    %v1325 = vunpack.c.l.b16 %v1294
    %v1326 = vunpack.c.l.b16 %v1295
    %v1327 = vunpack.c.l.b16 %v1296
    %v1328 = vunpack.c.l.b16 %v1297
    %v1329 = vpack.c.b16 %v1318, %v1317
    %v1330 = vpack.c.b16 %v1320, %v1319
    %v1331 = vpack.c.b16 %v1322, %v1321
    %v1332 = vpack.c.b16 %v1324, %v1323
    %v1333 = vpack.c.b16 %v1326, %v1325
    %v1334 = vpack.c.b16 %v1328, %v1327
    %v1342 = vsel %vm230, %v1298, 0
    %v1345 = vsel %vm230, %v1299, 0
    %1347 = vmatpush.bf16.msra.mxu0 0
    %1348 = vmatpush.bf16.msra.mxu0 0
    %1349 = vmatpush.bf16.msra.mxu0 %v1334
    %1350 = vmatpush.bf16.msra.mxu0 %v1333
    %1351 = vmatpush.bf16.msra.mxu0 %v1332
    %1352 = vmatpush.bf16.msra.mxu0 %v1331
    %1353 = vmatpush.bf16.msra.mxu0 %v1330
    %1354 = vmatpush.bf16.msra.mxu0 %v1329
    %1355 = vmatmul.bf16.gmra.mxu0 %v1342
    %v1356 = vpop.f32.mrf.mxu0
    %v1357 = vadd.f32 %v1303, %v1356
    %v1358 = vpop.f32.mrf.mxu0
    %v1359 = vadd.f32 %v1303, %v1358
    %1360 = vmatmul.bf16.gmra.mxu0 %v1345
    %v1361 = vpop.f32.mrf.mxu0
    %v1362 = vadd.f32 %v1303, %v1361
    %v1363 = vpop.f32.mrf.mxu0
    %v1364 = vadd.f32 %v1303, %v1363
    %1365 = vdwg.mxu0
    %1368 = vrot.lane.b32.xlu0 %v1357, 96
    %v1369 = vpop.permute.xlu0 %1368
    %1370 = vrot.lane.b32.xlu0 %v1359, 96
    %v1371 = vpop.permute.xlu0 %1370
    %v1372 = vsel %vm262, %v1357, 0
    %v1374 = vsel %vm262, %v1359, 0
    %v1376 = vsel %vm262, %v1369, 0
    %v1378 = vsel %vm262, %v1371, 0
    %1380 = vmatpush.xpose.msra.mxu0 0.0
    %1381 = vmatpush.xpose.msra.mxu0 0.0
    %1382 = vmatpush.xpose.msra.mxu0 0.0
    %1383 = vmatpush.xpose.msra.mxu0 0.0
    %1384 = vmatpush.xpose.msra.mxu0 0.0
    %1385 = vmatpush.xpose.msra.mxu0 0.0
    %1386 = vmatpush.xpose.msra.mxu0 0.0
    %1387 = vmatpush.xpose.msra.mxu0 0.0
    %1388 = vmatpush.xpose.msra.mxu0 0.0
    %1389 = vmatpush.xpose.msra.mxu0 0.0
    %1390 = vmatpush.xpose.msra.mxu0 0.0
    %1391 = vmatpush.xpose.msra.mxu0 0.0
    %1392 = vmatpush.xpose.msra.mxu0 0.0
    %1393 = vmatpush.xpose.msra.mxu0 0.0
    %1394 = vmatpush.xpose.msra.mxu0 %v1378
    %1395 = vmatpush.xpose.msra.mxu0 %v1376
    %1396 = vmatmul.f32.gmra.mxu0 %v1372
    %v1397 = vpop.f32.mrf.mxu0
    %v1398 = vadd.f32 %v80, %v1397
    %1399 = vmatmul.f32.gmra.mxu0 %v1374
    %v1400 = vpop.f32.mrf.mxu0
    %v1401 = vadd.f32 %v80, %v1400
    %1402 = vdwg.mxu0
    %v1403 = vsel %vm294, %v1398, -inf
    %1404 = vmax.xlane.f32.xlu0 %v1403
    %v1405 = vpop.xlane.xlu0 %1404
    %v1406 = vsel %vm294, %v1401, -inf
    %1407 = vmax.xlane.f32.xlu0 %v1406
    %v1408 = vpop.xlane.xlu0 %1407
    %v1409 = vsub.f32 %v1398, %v1405
    %v1410 = vsub.f32 %v1401, %v1408
    %v1411 = vmul.f32 %v1409, 1.442695
    %v1412 = vpow.pop %v1411
    %v1413 = vmul.f32 %v1410, 1.442695
    %v1414 = vpow.pop %v1413
    %v1415 = vsel %vm294, %v1412, 0.0
    %1416 = vadd.xlane.f32.xlu0 %v1415
    %v1417 = vpop.xlane.xlu0 %1416
    %v1418 = vsel %vm294, %v1414, 0.0
    %1419 = vadd.xlane.f32.xlu0 %v1418
    %v1420 = vpop.xlane.xlu0 %1419
    %v1421 = vrcp.pop %v1417
    %v1422 = vrcp.pop %v1420
    %v1423 = vmul.f32 %v1412, %v1421
    %v1424 = vmul.f32 %v1414, %v1422
    %1425 = vrot.lane.b32.xlu0 %v1357, 64
    %v1426 = vpop.permute.xlu0 %1425
    %1427 = vrot.lane.b32.xlu0 %v1359, 64
    %v1428 = vpop.permute.xlu0 %1427
    %v1432 = vsel %vm294, %v1423, 0
    %v1435 = vsel %vm294, %v1424, 0
    %1437 = vmatpush.msra.mxu0 0.0
    %1438 = vmatpush.msra.mxu0 0.0
    %1439 = vmatpush.msra.mxu0 0.0
    %1440 = vmatpush.msra.mxu0 0.0
    %1441 = vmatpush.msra.mxu0 0.0
    %1442 = vmatpush.msra.mxu0 0.0
    %1443 = vmatpush.msra.mxu0 0.0
    %1444 = vmatpush.msra.mxu0 0.0
    %1445 = vmatpush.msra.mxu0 0.0
    %1446 = vmatpush.msra.mxu0 0.0
    %1447 = vmatpush.msra.mxu0 0.0
    %1448 = vmatpush.msra.mxu0 0.0
    %1449 = vmatpush.msra.mxu0 0.0
    %1450 = vmatpush.msra.mxu0 0.0
    %1451 = vmatpush.msra.mxu0 %v1428
    %1452 = vmatpush.msra.mxu0 %v1426
    %1453 = vmatmul.f32.gmra.mxu0 %v1432
    %v1454 = vpop.f32.mrf.mxu0
    %v1455 = vadd.f32 0.0, %v1454
    %1456 = vmatmul.f32.gmra.mxu0 %v1435
    %v1457 = vpop.f32.mrf.mxu0
    %v1458 = vadd.f32 0.0, %v1457
    %1459 = vdwg.mxu0
    %1460 = vrot.lane.b32.xlu0 %v1357, 120
    %v1461 = vpop.permute.xlu0 %1460
    %1462 = vrot.lane.b32.xlu0 %v1359, 120
    %v1463 = vpop.permute.xlu0 %1462
    %1464 = vrot.lane.b32.xlu0 %v1357, 88
    %v1465 = vpop.permute.xlu0 %1464
    %1466 = vrot.lane.b32.xlu0 %v1359, 88
    %v1467 = vpop.permute.xlu0 %1466
    %v1468 = vsel %vm262, %v1461, 0
    %v1470 = vsel %vm262, %v1463, 0
    %v1472 = vsel %vm262, %v1465, 0
    %v1474 = vsel %vm262, %v1467, 0
    %1476 = vmatpush.xpose.msra.mxu0 0.0
    %1477 = vmatpush.xpose.msra.mxu0 0.0
    %1478 = vmatpush.xpose.msra.mxu0 0.0
    %1479 = vmatpush.xpose.msra.mxu0 0.0
    %1480 = vmatpush.xpose.msra.mxu0 0.0
    %1481 = vmatpush.xpose.msra.mxu0 0.0
    %1482 = vmatpush.xpose.msra.mxu0 0.0
    %1483 = vmatpush.xpose.msra.mxu0 0.0
    %1484 = vmatpush.xpose.msra.mxu0 0.0
    %1485 = vmatpush.xpose.msra.mxu0 0.0
    %1486 = vmatpush.xpose.msra.mxu0 0.0
    %1487 = vmatpush.xpose.msra.mxu0 0.0
    %1488 = vmatpush.xpose.msra.mxu0 0.0
    %1489 = vmatpush.xpose.msra.mxu0 0.0
    %1490 = vmatpush.xpose.msra.mxu0 %v1474
    %1491 = vmatpush.xpose.msra.mxu0 %v1472
    %1492 = vmatmul.f32.gmra.mxu0 %v1468
    %v1493 = vpop.f32.mrf.mxu0
    %v1494 = vadd.f32 %v80, %v1493
    %1495 = vmatmul.f32.gmra.mxu0 %v1470
    %v1496 = vpop.f32.mrf.mxu0
    %v1497 = vadd.f32 %v80, %v1496
    %1498 = vdwg.mxu0
    %v1499 = vsel %vm294, %v1494, -inf
    %1500 = vmax.xlane.f32.xlu0 %v1499
    %v1501 = vpop.xlane.xlu0 %1500
    %v1502 = vsel %vm294, %v1497, -inf
    %1503 = vmax.xlane.f32.xlu0 %v1502
    %v1504 = vpop.xlane.xlu0 %1503
    %v1505 = vsub.f32 %v1494, %v1501
    %v1506 = vsub.f32 %v1497, %v1504
    %v1507 = vmul.f32 %v1505, 1.442695
    %v1508 = vpow.pop %v1507
    %v1509 = vmul.f32 %v1506, 1.442695
    %v1510 = vpow.pop %v1509
    %v1511 = vsel %vm294, %v1508, 0.0
    %1512 = vadd.xlane.f32.xlu0 %v1511
    %v1513 = vpop.xlane.xlu0 %1512
    %v1514 = vsel %vm294, %v1510, 0.0
    %1515 = vadd.xlane.f32.xlu0 %v1514
    %v1516 = vpop.xlane.xlu0 %1515
    %v1517 = vrcp.pop %v1513
    %v1518 = vrcp.pop %v1516
    %v1519 = vmul.f32 %v1508, %v1517
    %v1520 = vmul.f32 %v1510, %v1518
    %1521 = vrot.lane.b32.xlu0 %v1357, 56
    %v1522 = vpop.permute.xlu0 %1521
    %1523 = vrot.lane.b32.xlu0 %v1359, 56
    %v1524 = vpop.permute.xlu0 %1523
    %v1528 = vsel %vm294, %v1519, 0
    %v1531 = vsel %vm294, %v1520, 0
    %1533 = vmatpush.msra.mxu0 0.0
    %1534 = vmatpush.msra.mxu0 0.0
    %1535 = vmatpush.msra.mxu0 0.0
    %1536 = vmatpush.msra.mxu0 0.0
    %1537 = vmatpush.msra.mxu0 0.0
    %1538 = vmatpush.msra.mxu0 0.0
    %1539 = vmatpush.msra.mxu0 0.0
    %1540 = vmatpush.msra.mxu0 0.0
    %1541 = vmatpush.msra.mxu0 0.0
    %1542 = vmatpush.msra.mxu0 0.0
    %1543 = vmatpush.msra.mxu0 0.0
    %1544 = vmatpush.msra.mxu0 0.0
    %1545 = vmatpush.msra.mxu0 0.0
    %1546 = vmatpush.msra.mxu0 0.0
    %1547 = vmatpush.msra.mxu0 %v1524
    %1548 = vmatpush.msra.mxu0 %v1522
    %1549 = vmatmul.f32.gmra.mxu0 %v1528
    %v1550 = vpop.f32.mrf.mxu0
    %v1551 = vadd.f32 0.0, %v1550
    %1552 = vmatmul.f32.gmra.mxu0 %v1531
    %v1553 = vpop.f32.mrf.mxu0
    %v1554 = vadd.f32 0.0, %v1553
    %1555 = vdwg.mxu0
    %1556 = vrot.lane.b32.xlu0 %v1357, 112
    %v1557 = vpop.permute.xlu0 %1556
    %1558 = vrot.lane.b32.xlu0 %v1359, 112
    %v1559 = vpop.permute.xlu0 %1558
    %1560 = vrot.lane.b32.xlu0 %v1357, 80
    %v1561 = vpop.permute.xlu0 %1560
    %1562 = vrot.lane.b32.xlu0 %v1359, 80
    %v1563 = vpop.permute.xlu0 %1562
    %v1564 = vsel %vm262, %v1557, 0
    %v1566 = vsel %vm262, %v1559, 0
    %v1568 = vsel %vm262, %v1561, 0
    %v1570 = vsel %vm262, %v1563, 0
    %1572 = vmatpush.xpose.msra.mxu0 0.0
    %1573 = vmatpush.xpose.msra.mxu0 0.0
    %1574 = vmatpush.xpose.msra.mxu0 0.0
    %1575 = vmatpush.xpose.msra.mxu0 0.0
    %1576 = vmatpush.xpose.msra.mxu0 0.0
    %1577 = vmatpush.xpose.msra.mxu0 0.0
    %1578 = vmatpush.xpose.msra.mxu0 0.0
    %1579 = vmatpush.xpose.msra.mxu0 0.0
    %1580 = vmatpush.xpose.msra.mxu0 0.0
    %1581 = vmatpush.xpose.msra.mxu0 0.0
    %1582 = vmatpush.xpose.msra.mxu0 0.0
    %1583 = vmatpush.xpose.msra.mxu0 0.0
    %1584 = vmatpush.xpose.msra.mxu0 0.0
    %1585 = vmatpush.xpose.msra.mxu0 0.0
    %1586 = vmatpush.xpose.msra.mxu0 %v1570
    %1587 = vmatpush.xpose.msra.mxu0 %v1568
    %1588 = vmatmul.f32.gmra.mxu0 %v1564
    %v1589 = vpop.f32.mrf.mxu0
    %v1590 = vadd.f32 %v80, %v1589
    %1591 = vmatmul.f32.gmra.mxu0 %v1566
    %v1592 = vpop.f32.mrf.mxu0
    %v1593 = vadd.f32 %v80, %v1592
    %1594 = vdwg.mxu0
    %v1595 = vsel %vm294, %v1590, -inf
    %1596 = vmax.xlane.f32.xlu0 %v1595
    %v1597 = vpop.xlane.xlu0 %1596
    %v1598 = vsel %vm294, %v1593, -inf
    %1599 = vmax.xlane.f32.xlu0 %v1598
    %v1600 = vpop.xlane.xlu0 %1599
    %v1601 = vsub.f32 %v1590, %v1597
    %v1602 = vsub.f32 %v1593, %v1600
    %v1603 = vmul.f32 %v1601, 1.442695
    %v1604 = vpow.pop %v1603
    %v1605 = vmul.f32 %v1602, 1.442695
    %v1606 = vpow.pop %v1605
    %v1607 = vsel %vm294, %v1604, 0.0
    %1608 = vadd.xlane.f32.xlu0 %v1607
    %v1609 = vpop.xlane.xlu0 %1608
    %v1610 = vsel %vm294, %v1606, 0.0
    %1611 = vadd.xlane.f32.xlu0 %v1610
    %v1612 = vpop.xlane.xlu0 %1611
    %v1613 = vrcp.pop %v1609
    %v1614 = vrcp.pop %v1612
    %v1615 = vmul.f32 %v1604, %v1613
    %v1616 = vmul.f32 %v1606, %v1614
    %1617 = vrot.lane.b32.xlu0 %v1357, 48
    %v1618 = vpop.permute.xlu0 %1617
    %1619 = vrot.lane.b32.xlu0 %v1359, 48
    %v1620 = vpop.permute.xlu0 %1619
    %v1624 = vsel %vm294, %v1615, 0
    %v1627 = vsel %vm294, %v1616, 0
    %1629 = vmatpush.msra.mxu0 0.0
    %1630 = vmatpush.msra.mxu0 0.0
    %1631 = vmatpush.msra.mxu0 0.0
    %1632 = vmatpush.msra.mxu0 0.0
    %1633 = vmatpush.msra.mxu0 0.0
    %1634 = vmatpush.msra.mxu0 0.0
    %1635 = vmatpush.msra.mxu0 0.0
    %1636 = vmatpush.msra.mxu0 0.0
    %1637 = vmatpush.msra.mxu0 0.0
    %1638 = vmatpush.msra.mxu0 0.0
    %1639 = vmatpush.msra.mxu0 0.0
    %1640 = vmatpush.msra.mxu0 0.0
    %1641 = vmatpush.msra.mxu0 0.0
    %1642 = vmatpush.msra.mxu0 0.0
    %1643 = vmatpush.msra.mxu0 %v1620
    %1644 = vmatpush.msra.mxu0 %v1618
    %1645 = vmatmul.f32.gmra.mxu0 %v1624
    %v1646 = vpop.f32.mrf.mxu0
    %v1647 = vadd.f32 0.0, %v1646
    %1648 = vmatmul.f32.gmra.mxu0 %v1627
    %v1649 = vpop.f32.mrf.mxu0
    %v1650 = vadd.f32 0.0, %v1649
    %1651 = vdwg.mxu0
    %1652 = vrot.lane.b32.xlu0 %v1357, 104
    %v1653 = vpop.permute.xlu0 %1652
    %1654 = vrot.lane.b32.xlu0 %v1359, 104
    %v1655 = vpop.permute.xlu0 %1654
    %1656 = vrot.lane.b32.xlu0 %v1357, 72
    %v1657 = vpop.permute.xlu0 %1656
    %1658 = vrot.lane.b32.xlu0 %v1359, 72
    %v1659 = vpop.permute.xlu0 %1658
    %v1660 = vsel %vm262, %v1653, 0
    %v1662 = vsel %vm262, %v1655, 0
    %v1664 = vsel %vm262, %v1657, 0
    %v1666 = vsel %vm262, %v1659, 0
    %1668 = vmatpush.xpose.msra.mxu0 0.0
    %1669 = vmatpush.xpose.msra.mxu0 0.0
    %1670 = vmatpush.xpose.msra.mxu0 0.0
    %1671 = vmatpush.xpose.msra.mxu0 0.0
    %1672 = vmatpush.xpose.msra.mxu0 0.0
    %1673 = vmatpush.xpose.msra.mxu0 0.0
    %1674 = vmatpush.xpose.msra.mxu0 0.0
    %1675 = vmatpush.xpose.msra.mxu0 0.0
    %1676 = vmatpush.xpose.msra.mxu0 0.0
    %1677 = vmatpush.xpose.msra.mxu0 0.0
    %1678 = vmatpush.xpose.msra.mxu0 0.0
    %1679 = vmatpush.xpose.msra.mxu0 0.0
    %1680 = vmatpush.xpose.msra.mxu0 0.0
    %1681 = vmatpush.xpose.msra.mxu0 0.0
    %1682 = vmatpush.xpose.msra.mxu0 %v1666
    %1683 = vmatpush.xpose.msra.mxu0 %v1664
    %1684 = vmatmul.f32.gmra.mxu0 %v1660
    %v1685 = vpop.f32.mrf.mxu0
    %v1686 = vadd.f32 %v80, %v1685
    %1687 = vmatmul.f32.gmra.mxu0 %v1662
    %v1688 = vpop.f32.mrf.mxu0
    %v1689 = vadd.f32 %v80, %v1688
    %1690 = vdwg.mxu0
    %v1691 = vsel %vm294, %v1686, -inf
    %1692 = vmax.xlane.f32.xlu0 %v1691
    %v1693 = vpop.xlane.xlu0 %1692
    %v1694 = vsel %vm294, %v1689, -inf
    %1695 = vmax.xlane.f32.xlu0 %v1694
    %v1696 = vpop.xlane.xlu0 %1695
    %v1697 = vsub.f32 %v1686, %v1693
    %v1698 = vsub.f32 %v1689, %v1696
    %v1699 = vmul.f32 %v1697, 1.442695
    %v1700 = vpow.pop %v1699
    %v1701 = vmul.f32 %v1698, 1.442695
    %v1702 = vpow.pop %v1701
    %v1703 = vsel %vm294, %v1700, 0.0
    %1704 = vadd.xlane.f32.xlu0 %v1703
    %v1705 = vpop.xlane.xlu0 %1704
    %v1706 = vsel %vm294, %v1702, 0.0
    %1707 = vadd.xlane.f32.xlu0 %v1706
    %v1708 = vpop.xlane.xlu0 %1707
    %v1709 = vrcp.pop %v1705
    %v1710 = vrcp.pop %v1708
    %v1711 = vmul.f32 %v1700, %v1709
    %v1712 = vmul.f32 %v1702, %v1710
    %1713 = vrot.lane.b32.xlu0 %v1357, 40
    %v1714 = vpop.permute.xlu0 %1713
    %1715 = vrot.lane.b32.xlu0 %v1359, 40
    %v1716 = vpop.permute.xlu0 %1715
    %v1720 = vsel %vm294, %v1711, 0
    %v1723 = vsel %vm294, %v1712, 0
    %1725 = vmatpush.msra.mxu0 0.0
    %1726 = vmatpush.msra.mxu0 0.0
    %1727 = vmatpush.msra.mxu0 0.0
    %1728 = vmatpush.msra.mxu0 0.0
    %1729 = vmatpush.msra.mxu0 0.0
    %1730 = vmatpush.msra.mxu0 0.0
    %1731 = vmatpush.msra.mxu0 0.0
    %1732 = vmatpush.msra.mxu0 0.0
    %1733 = vmatpush.msra.mxu0 0.0
    %1734 = vmatpush.msra.mxu0 0.0
    %1735 = vmatpush.msra.mxu0 0.0
    %1736 = vmatpush.msra.mxu0 0.0
    %1737 = vmatpush.msra.mxu0 0.0
    %1738 = vmatpush.msra.mxu0 0.0
    %1739 = vmatpush.msra.mxu0 %v1716
    %1740 = vmatpush.msra.mxu0 %v1714
    %1741 = vmatmul.f32.gmra.mxu0 %v1720
    %v1742 = vpop.f32.mrf.mxu0
    %v1743 = vadd.f32 0.0, %v1742
    %1744 = vmatmul.f32.gmra.mxu0 %v1723
    %v1745 = vpop.f32.mrf.mxu0
    %v1746 = vadd.f32 0.0, %v1745
    %1747 = vdwg.mxu0
    %1750 = vrot.lane.b32.xlu0 %v1551, 8
    %v1751 = vpop.permute.xlu0 %1750
    %1752 = vrot.lane.b32.xlu0 %v1554, 8
    %v1753 = vpop.permute.xlu0 %1752
    %1758 = vrot.lane.b32.xlu0 %v1647, 16
    %v1759 = vpop.permute.xlu0 %1758
    %1760 = vrot.lane.b32.xlu0 %v1650, 16
    %v1761 = vpop.permute.xlu0 %1760
    %1766 = vrot.lane.b32.xlu0 %v1743, 24
    %v1767 = vpop.permute.xlu0 %1766
    %1768 = vrot.lane.b32.xlu0 %v1746, 24
    %v1769 = vpop.permute.xlu0 %1768
    %v1772 = vsel %vm262, %v1455, %v1751
    %v1773 = vsel %vm262, %v1458, %v1753
    %v1774 = vsel %vm294, %v1772, %v1759
    %v1775 = vsel %vm294, %v1773, %v1761
    %v1776 = vsel %vm668, %v1774, %v1767
    %v1777 = vsel %vm668, %v1775, %v1769
    %1780 = vrot.lane.b32.xlu0 %v1362, 96
    %v1781 = vpop.permute.xlu0 %1780
    %1782 = vrot.lane.b32.xlu0 %v1364, 96
    %v1783 = vpop.permute.xlu0 %1782
    %v1784 = vsel %vm262, %v1362, 0
    %v1786 = vsel %vm262, %v1364, 0
    %v1788 = vsel %vm262, %v1781, 0
    %v1790 = vsel %vm262, %v1783, 0
    %1792 = vmatpush.xpose.msra.mxu0 0.0
    %1793 = vmatpush.xpose.msra.mxu0 0.0
    %1794 = vmatpush.xpose.msra.mxu0 0.0
    %1795 = vmatpush.xpose.msra.mxu0 0.0
    %1796 = vmatpush.xpose.msra.mxu0 0.0
    %1797 = vmatpush.xpose.msra.mxu0 0.0
    %1798 = vmatpush.xpose.msra.mxu0 0.0
    %1799 = vmatpush.xpose.msra.mxu0 0.0
    %1800 = vmatpush.xpose.msra.mxu0 0.0
    %1801 = vmatpush.xpose.msra.mxu0 0.0
    %1802 = vmatpush.xpose.msra.mxu0 0.0
    %1803 = vmatpush.xpose.msra.mxu0 0.0
    %1804 = vmatpush.xpose.msra.mxu0 0.0
    %1805 = vmatpush.xpose.msra.mxu0 0.0
    %1806 = vmatpush.xpose.msra.mxu0 %v1790
    %1807 = vmatpush.xpose.msra.mxu0 %v1788
    %1808 = vmatmul.f32.gmra.mxu0 %v1784
    %v1809 = vpop.f32.mrf.mxu0
    %v1810 = vadd.f32 %v80, %v1809
    %1811 = vmatmul.f32.gmra.mxu0 %v1786
    %v1812 = vpop.f32.mrf.mxu0
    %v1813 = vadd.f32 %v80, %v1812
    %1814 = vdwg.mxu0
    %v1815 = vsel %vm294, %v1810, -inf
    %1816 = vmax.xlane.f32.xlu0 %v1815
    %v1817 = vpop.xlane.xlu0 %1816
    %v1818 = vsel %vm294, %v1813, -inf
    %1819 = vmax.xlane.f32.xlu0 %v1818
    %v1820 = vpop.xlane.xlu0 %1819
    %v1821 = vsub.f32 %v1810, %v1817
    %v1822 = vsub.f32 %v1813, %v1820
    %v1823 = vmul.f32 %v1821, 1.442695
    %v1824 = vpow.pop %v1823
    %v1825 = vmul.f32 %v1822, 1.442695
    %v1826 = vpow.pop %v1825
    %v1827 = vsel %vm294, %v1824, 0.0
    %1828 = vadd.xlane.f32.xlu0 %v1827
    %v1829 = vpop.xlane.xlu0 %1828
    %v1830 = vsel %vm294, %v1826, 0.0
    %1831 = vadd.xlane.f32.xlu0 %v1830
    %v1832 = vpop.xlane.xlu0 %1831
    %v1833 = vrcp.pop %v1829
    %v1834 = vrcp.pop %v1832
    %v1835 = vmul.f32 %v1824, %v1833
    %v1836 = vmul.f32 %v1826, %v1834
    %1837 = vrot.lane.b32.xlu0 %v1362, 64
    %v1838 = vpop.permute.xlu0 %1837
    %1839 = vrot.lane.b32.xlu0 %v1364, 64
    %v1840 = vpop.permute.xlu0 %1839
    %v1844 = vsel %vm294, %v1835, 0
    %v1847 = vsel %vm294, %v1836, 0
    %1849 = vmatpush.msra.mxu0 0.0
    %1850 = vmatpush.msra.mxu0 0.0
    %1851 = vmatpush.msra.mxu0 0.0
    %1852 = vmatpush.msra.mxu0 0.0
    %1853 = vmatpush.msra.mxu0 0.0
    %1854 = vmatpush.msra.mxu0 0.0
    %1855 = vmatpush.msra.mxu0 0.0
    %1856 = vmatpush.msra.mxu0 0.0
    %1857 = vmatpush.msra.mxu0 0.0
    %1858 = vmatpush.msra.mxu0 0.0
    %1859 = vmatpush.msra.mxu0 0.0
    %1860 = vmatpush.msra.mxu0 0.0
    %1861 = vmatpush.msra.mxu0 0.0
    %1862 = vmatpush.msra.mxu0 0.0
    %1863 = vmatpush.msra.mxu0 %v1840
    %1864 = vmatpush.msra.mxu0 %v1838
    %1865 = vmatmul.f32.gmra.mxu0 %v1844
    %v1866 = vpop.f32.mrf.mxu0
    %v1867 = vadd.f32 0.0, %v1866
    %1868 = vmatmul.f32.gmra.mxu0 %v1847
    %v1869 = vpop.f32.mrf.mxu0
    %v1870 = vadd.f32 0.0, %v1869
    %1871 = vdwg.mxu0
    %1872 = vrot.lane.b32.xlu0 %v1362, 120
    %v1873 = vpop.permute.xlu0 %1872
    %1874 = vrot.lane.b32.xlu0 %v1364, 120
    %v1875 = vpop.permute.xlu0 %1874
    %1876 = vrot.lane.b32.xlu0 %v1362, 88
    %v1877 = vpop.permute.xlu0 %1876
    %1878 = vrot.lane.b32.xlu0 %v1364, 88
    %v1879 = vpop.permute.xlu0 %1878
    %v1880 = vsel %vm262, %v1873, 0
    %v1882 = vsel %vm262, %v1875, 0
    %v1884 = vsel %vm262, %v1877, 0
    %v1886 = vsel %vm262, %v1879, 0
    %1888 = vmatpush.xpose.msra.mxu0 0.0
    %1889 = vmatpush.xpose.msra.mxu0 0.0
    %1890 = vmatpush.xpose.msra.mxu0 0.0
    %1891 = vmatpush.xpose.msra.mxu0 0.0
    %1892 = vmatpush.xpose.msra.mxu0 0.0
    %1893 = vmatpush.xpose.msra.mxu0 0.0
    %1894 = vmatpush.xpose.msra.mxu0 0.0
    %1895 = vmatpush.xpose.msra.mxu0 0.0
    %1896 = vmatpush.xpose.msra.mxu0 0.0
    %1897 = vmatpush.xpose.msra.mxu0 0.0
    %1898 = vmatpush.xpose.msra.mxu0 0.0
    %1899 = vmatpush.xpose.msra.mxu0 0.0
    %1900 = vmatpush.xpose.msra.mxu0 0.0
    %1901 = vmatpush.xpose.msra.mxu0 0.0
    %1902 = vmatpush.xpose.msra.mxu0 %v1886
    %1903 = vmatpush.xpose.msra.mxu0 %v1884
    %1904 = vmatmul.f32.gmra.mxu0 %v1880
    %v1905 = vpop.f32.mrf.mxu0
    %v1906 = vadd.f32 %v80, %v1905
    %1907 = vmatmul.f32.gmra.mxu0 %v1882
    %v1908 = vpop.f32.mrf.mxu0
    %v1909 = vadd.f32 %v80, %v1908
    %1910 = vdwg.mxu0
    %v1911 = vsel %vm294, %v1906, -inf
    %1912 = vmax.xlane.f32.xlu0 %v1911
    %v1913 = vpop.xlane.xlu0 %1912
    %v1914 = vsel %vm294, %v1909, -inf
    %1915 = vmax.xlane.f32.xlu0 %v1914
    %v1916 = vpop.xlane.xlu0 %1915
    %v1917 = vsub.f32 %v1906, %v1913
    %v1918 = vsub.f32 %v1909, %v1916
    %v1919 = vmul.f32 %v1917, 1.442695
    %v1920 = vpow.pop %v1919
    %v1921 = vmul.f32 %v1918, 1.442695
    %v1922 = vpow.pop %v1921
    %v1923 = vsel %vm294, %v1920, 0.0
    %1924 = vadd.xlane.f32.xlu0 %v1923
    %v1925 = vpop.xlane.xlu0 %1924
    %v1926 = vsel %vm294, %v1922, 0.0
    %1927 = vadd.xlane.f32.xlu0 %v1926
    %v1928 = vpop.xlane.xlu0 %1927
    %v1929 = vrcp.pop %v1925
    %v1930 = vrcp.pop %v1928
    %v1931 = vmul.f32 %v1920, %v1929
    %v1932 = vmul.f32 %v1922, %v1930
    %1933 = vrot.lane.b32.xlu0 %v1362, 56
    %v1934 = vpop.permute.xlu0 %1933
    %1935 = vrot.lane.b32.xlu0 %v1364, 56
    %v1936 = vpop.permute.xlu0 %1935
    %v1940 = vsel %vm294, %v1931, 0
    %v1943 = vsel %vm294, %v1932, 0
    %1945 = vmatpush.msra.mxu0 0.0
    %1946 = vmatpush.msra.mxu0 0.0
    %1947 = vmatpush.msra.mxu0 0.0
    %1948 = vmatpush.msra.mxu0 0.0
    %1949 = vmatpush.msra.mxu0 0.0
    %1950 = vmatpush.msra.mxu0 0.0
    %1951 = vmatpush.msra.mxu0 0.0
    %1952 = vmatpush.msra.mxu0 0.0
    %1953 = vmatpush.msra.mxu0 0.0
    %1954 = vmatpush.msra.mxu0 0.0
    %1955 = vmatpush.msra.mxu0 0.0
    %1956 = vmatpush.msra.mxu0 0.0
    %1957 = vmatpush.msra.mxu0 0.0
    %1958 = vmatpush.msra.mxu0 0.0
    %1959 = vmatpush.msra.mxu0 %v1936
    %1960 = vmatpush.msra.mxu0 %v1934
    %1961 = vmatmul.f32.gmra.mxu0 %v1940
    %v1962 = vpop.f32.mrf.mxu0
    %v1963 = vadd.f32 0.0, %v1962
    %1964 = vmatmul.f32.gmra.mxu0 %v1943
    %v1965 = vpop.f32.mrf.mxu0
    %v1966 = vadd.f32 0.0, %v1965
    %1967 = vdwg.mxu0
    %1968 = vrot.lane.b32.xlu0 %v1362, 112
    %v1969 = vpop.permute.xlu0 %1968
    %1970 = vrot.lane.b32.xlu0 %v1364, 112
    %v1971 = vpop.permute.xlu0 %1970
    %1972 = vrot.lane.b32.xlu0 %v1362, 80
    %v1973 = vpop.permute.xlu0 %1972
    %1974 = vrot.lane.b32.xlu0 %v1364, 80
    %v1975 = vpop.permute.xlu0 %1974
    %v1976 = vsel %vm262, %v1969, 0
    %v1978 = vsel %vm262, %v1971, 0
    %v1980 = vsel %vm262, %v1973, 0
    %v1982 = vsel %vm262, %v1975, 0
    %1984 = vmatpush.xpose.msra.mxu0 0.0
    %1985 = vmatpush.xpose.msra.mxu0 0.0
    %1986 = vmatpush.xpose.msra.mxu0 0.0
    %1987 = vmatpush.xpose.msra.mxu0 0.0
    %1988 = vmatpush.xpose.msra.mxu0 0.0
    %1989 = vmatpush.xpose.msra.mxu0 0.0
    %1990 = vmatpush.xpose.msra.mxu0 0.0
    %1991 = vmatpush.xpose.msra.mxu0 0.0
    %1992 = vmatpush.xpose.msra.mxu0 0.0
    %1993 = vmatpush.xpose.msra.mxu0 0.0
    %1994 = vmatpush.xpose.msra.mxu0 0.0
    %1995 = vmatpush.xpose.msra.mxu0 0.0
    %1996 = vmatpush.xpose.msra.mxu0 0.0
    %1997 = vmatpush.xpose.msra.mxu0 0.0
    %1998 = vmatpush.xpose.msra.mxu0 %v1982
    %1999 = vmatpush.xpose.msra.mxu0 %v1980
    %2000 = vmatmul.f32.gmra.mxu0 %v1976
    %v2001 = vpop.f32.mrf.mxu0
    %v2002 = vadd.f32 %v80, %v2001
    %2003 = vmatmul.f32.gmra.mxu0 %v1978
    %v2004 = vpop.f32.mrf.mxu0
    %v2005 = vadd.f32 %v80, %v2004
    %2006 = vdwg.mxu0
    %v2007 = vsel %vm294, %v2002, -inf
    %2008 = vmax.xlane.f32.xlu0 %v2007
    %v2009 = vpop.xlane.xlu0 %2008
    %v2010 = vsel %vm294, %v2005, -inf
    %2011 = vmax.xlane.f32.xlu0 %v2010
    %v2012 = vpop.xlane.xlu0 %2011
    %v2013 = vsub.f32 %v2002, %v2009
    %v2014 = vsub.f32 %v2005, %v2012
    %v2015 = vmul.f32 %v2013, 1.442695
    %v2016 = vpow.pop %v2015
    %v2017 = vmul.f32 %v2014, 1.442695
    %v2018 = vpow.pop %v2017
    %v2019 = vsel %vm294, %v2016, 0.0
    %2020 = vadd.xlane.f32.xlu0 %v2019
    %v2021 = vpop.xlane.xlu0 %2020
    %v2022 = vsel %vm294, %v2018, 0.0
    %2023 = vadd.xlane.f32.xlu0 %v2022
    %v2024 = vpop.xlane.xlu0 %2023
    %v2025 = vrcp.pop %v2021
    %v2026 = vrcp.pop %v2024
    %v2027 = vmul.f32 %v2016, %v2025
    %v2028 = vmul.f32 %v2018, %v2026
    %2029 = vrot.lane.b32.xlu0 %v1362, 48
    %v2030 = vpop.permute.xlu0 %2029
    %2031 = vrot.lane.b32.xlu0 %v1364, 48
    %v2032 = vpop.permute.xlu0 %2031
    %v2036 = vsel %vm294, %v2027, 0
    %v2039 = vsel %vm294, %v2028, 0
    %2041 = vmatpush.msra.mxu0 0.0
    %2042 = vmatpush.msra.mxu0 0.0
    %2043 = vmatpush.msra.mxu0 0.0
    %2044 = vmatpush.msra.mxu0 0.0
    %2045 = vmatpush.msra.mxu0 0.0
    %2046 = vmatpush.msra.mxu0 0.0
    %2047 = vmatpush.msra.mxu0 0.0
    %2048 = vmatpush.msra.mxu0 0.0
    %2049 = vmatpush.msra.mxu0 0.0
    %2050 = vmatpush.msra.mxu0 0.0
    %2051 = vmatpush.msra.mxu0 0.0
    %2052 = vmatpush.msra.mxu0 0.0
    %2053 = vmatpush.msra.mxu0 0.0
    %2054 = vmatpush.msra.mxu0 0.0
    %2055 = vmatpush.msra.mxu0 %v2032
    %2056 = vmatpush.msra.mxu0 %v2030
    %2057 = vmatmul.f32.gmra.mxu0 %v2036
    %v2058 = vpop.f32.mrf.mxu0
    %v2059 = vadd.f32 0.0, %v2058
    %2060 = vmatmul.f32.gmra.mxu0 %v2039
    %v2061 = vpop.f32.mrf.mxu0
    %v2062 = vadd.f32 0.0, %v2061
    %2063 = vdwg.mxu0
    %2064 = vrot.lane.b32.xlu0 %v1362, 104
    %v2065 = vpop.permute.xlu0 %2064
    %2066 = vrot.lane.b32.xlu0 %v1364, 104
    %v2067 = vpop.permute.xlu0 %2066
    %2068 = vrot.lane.b32.xlu0 %v1362, 72
    %v2069 = vpop.permute.xlu0 %2068
    %2070 = vrot.lane.b32.xlu0 %v1364, 72
    %v2071 = vpop.permute.xlu0 %2070
    %v2072 = vsel %vm262, %v2065, 0
    %v2074 = vsel %vm262, %v2067, 0
    %v2076 = vsel %vm262, %v2069, 0
    %v2078 = vsel %vm262, %v2071, 0
    %2080 = vmatpush.xpose.msra.mxu0 0.0
    %2081 = vmatpush.xpose.msra.mxu0 0.0
    %2082 = vmatpush.xpose.msra.mxu0 0.0
    %2083 = vmatpush.xpose.msra.mxu0 0.0
    %2084 = vmatpush.xpose.msra.mxu0 0.0
    %2085 = vmatpush.xpose.msra.mxu0 0.0
    %2086 = vmatpush.xpose.msra.mxu0 0.0
    %2087 = vmatpush.xpose.msra.mxu0 0.0
    %2088 = vmatpush.xpose.msra.mxu0 0.0
    %2089 = vmatpush.xpose.msra.mxu0 0.0
    %2090 = vmatpush.xpose.msra.mxu0 0.0
    %2091 = vmatpush.xpose.msra.mxu0 0.0
    %2092 = vmatpush.xpose.msra.mxu0 0.0
    %2093 = vmatpush.xpose.msra.mxu0 0.0
    %2094 = vmatpush.xpose.msra.mxu0 %v2078
    %2095 = vmatpush.xpose.msra.mxu0 %v2076
    %2096 = vmatmul.f32.gmra.mxu0 %v2072
    %v2097 = vpop.f32.mrf.mxu0
    %v2098 = vadd.f32 %v80, %v2097
    %2099 = vmatmul.f32.gmra.mxu0 %v2074
    %v2100 = vpop.f32.mrf.mxu0
    %v2101 = vadd.f32 %v80, %v2100
    %2102 = vdwg.mxu0
    %v2103 = vsel %vm294, %v2098, -inf
    %2104 = vmax.xlane.f32.xlu0 %v2103
    %v2105 = vpop.xlane.xlu0 %2104
    %v2106 = vsel %vm294, %v2101, -inf
    %2107 = vmax.xlane.f32.xlu0 %v2106
    %v2108 = vpop.xlane.xlu0 %2107
    %v2109 = vsub.f32 %v2098, %v2105
    %v2110 = vsub.f32 %v2101, %v2108
    %v2111 = vmul.f32 %v2109, 1.442695
    %v2112 = vpow.pop %v2111
    %v2113 = vmul.f32 %v2110, 1.442695
    %v2114 = vpow.pop %v2113
    %v2115 = vsel %vm294, %v2112, 0.0
    %2116 = vadd.xlane.f32.xlu0 %v2115
    %v2117 = vpop.xlane.xlu0 %2116
    %v2118 = vsel %vm294, %v2114, 0.0
    %2119 = vadd.xlane.f32.xlu0 %v2118
    %v2120 = vpop.xlane.xlu0 %2119
    %v2121 = vrcp.pop %v2117
    %v2122 = vrcp.pop %v2120
    %v2123 = vmul.f32 %v2112, %v2121
    %v2124 = vmul.f32 %v2114, %v2122
    %2125 = vrot.lane.b32.xlu0 %v1362, 40
    %v2126 = vpop.permute.xlu0 %2125
    %2127 = vrot.lane.b32.xlu0 %v1364, 40
    %v2128 = vpop.permute.xlu0 %2127
    %v2132 = vsel %vm294, %v2123, 0
    %v2135 = vsel %vm294, %v2124, 0
    %2137 = vmatpush.msra.mxu0 0.0
    %2138 = vmatpush.msra.mxu0 0.0
    %2139 = vmatpush.msra.mxu0 0.0
    %2140 = vmatpush.msra.mxu0 0.0
    %2141 = vmatpush.msra.mxu0 0.0
    %2142 = vmatpush.msra.mxu0 0.0
    %2143 = vmatpush.msra.mxu0 0.0
    %2144 = vmatpush.msra.mxu0 0.0
    %2145 = vmatpush.msra.mxu0 0.0
    %2146 = vmatpush.msra.mxu0 0.0
    %2147 = vmatpush.msra.mxu0 0.0
    %2148 = vmatpush.msra.mxu0 0.0
    %2149 = vmatpush.msra.mxu0 0.0
    %2150 = vmatpush.msra.mxu0 0.0
    %2151 = vmatpush.msra.mxu0 %v2128
    %2152 = vmatpush.msra.mxu0 %v2126
    %2153 = vmatmul.f32.gmra.mxu0 %v2132
    %v2154 = vpop.f32.mrf.mxu0
    %v2155 = vadd.f32 0.0, %v2154
    %2156 = vmatmul.f32.gmra.mxu0 %v2135
    %v2157 = vpop.f32.mrf.mxu0
    %v2158 = vadd.f32 0.0, %v2157
    %2159 = vdwg.mxu0
    %2162 = vrot.lane.b32.xlu0 %v1963, 8
    %v2163 = vpop.permute.xlu0 %2162
    %2164 = vrot.lane.b32.xlu0 %v1966, 8
    %v2165 = vpop.permute.xlu0 %2164
    %2170 = vrot.lane.b32.xlu0 %v2059, 16
    %v2171 = vpop.permute.xlu0 %2170
    %2172 = vrot.lane.b32.xlu0 %v2062, 16
    %v2173 = vpop.permute.xlu0 %2172
    %2178 = vrot.lane.b32.xlu0 %v2155, 24
    %v2179 = vpop.permute.xlu0 %2178
    %2180 = vrot.lane.b32.xlu0 %v2158, 24
    %v2181 = vpop.permute.xlu0 %2180
    %v2184 = vsel %vm262, %v1867, %v2163
    %v2185 = vsel %vm262, %v1870, %v2165
    %v2186 = vsel %vm294, %v2184, %v2171
    %v2187 = vsel %vm294, %v2185, %v2173
    %v2188 = vsel %vm668, %v2186, %v2179
    %v2189 = vsel %vm668, %v2187, %v2181
    %s2190 = scalar_lea.vmem [#allocation4], 16
    %v2191 = vld [vmem:[%s2190] sm:$0xf]
    %v2192 = vld [vmem:[%s2190 + $0x4] sm:$0xf]
    %v2193 = vld [vmem:[%s2190 + $0x8] sm:$0xf]
    %v2194 = vld [vmem:[%s2190 + $0xc] sm:$0xf]
    %v2195 = vpack.c.bf16 %v1777, %v1776
    %v2196 = vpack.c.bf16 %v2189, %v2188
    %s2197 = scalar_lea.vmem %s6, 1
    %v2198 = vld [vmem:[%s2197] sm:$0x1]
    %v2200 = vperm.slane %v2198, 0
    %v2206 = vunpack.c.l.b16 %v2191
    %v2207 = vunpack.c.l.b16 %v2192
    %v2208 = vunpack.c.l.b16 %v2193
    %v2209 = vunpack.c.l.b16 %v2194
    %v2210 = vpack.c.b16 %v2207, %v2206
    %v2211 = vpack.c.b16 %v2209, %v2208
    %v2215 = vsel %vm103, %v2195, 0
    %v2218 = vsel %vm103, %v2196, 0
    %2220 = vmatpush.bf16.msra.mxu0 0
    %2221 = vmatpush.bf16.msra.mxu0 0
    %2222 = vmatpush.bf16.msra.mxu0 0
    %2223 = vmatpush.bf16.msra.mxu0 0
    %2224 = vmatpush.bf16.msra.mxu0 0
    %2225 = vmatpush.bf16.msra.mxu0 0
    %2226 = vmatpush.bf16.msra.mxu0 %v2211
    %2227 = vmatpush.bf16.msra.mxu0 %v2210
    %2228 = vmatmul.bf16.gmra.mxu0 %v2215
    %v2229 = vpop.f32.mrf.mxu0
    %v2230 = vadd.f32 %v2200, %v2229
    %v2231 = vpop.f32.mrf.mxu0
    %v2232 = vadd.f32 %v2200, %v2231
    %2233 = vmatmul.bf16.gmra.mxu0 %v2218
    %v2234 = vpop.f32.mrf.mxu0
    %v2235 = vadd.f32 %v2200, %v2234
    %v2236 = vpop.f32.mrf.mxu0
    %v2237 = vadd.f32 %v2200, %v2236
    %2238 = vdwg.mxu0
    %v2239 = vadd.f32 %v2230, %v1233
    %v2240 = vadd.f32 %v2232, %v1234
    %v2241 = vadd.f32 %v2235, %v1235
    %v2242 = vadd.f32 %v2237, %v1236
    %s2243 = scalar_lea.vmem [#allocation6], 32
    %v2244 = vld [vmem:[%s2243] sm:$0xf]
    %v2245 = vld [vmem:[%s2243 + $0x4] sm:$0xf]
    %v2246 = vld [vmem:[%s2243 + $0x8] sm:$0xf]
    %v2247 = vld [vmem:[%s2243 + $0xc] sm:$0xf]
    %v2248 = vpack.c.bf16 %v2240, %v2239
    %v2249 = vpack.c.bf16 %v2242, %v2241
    %v2254 = vunpack.c.l.b16 %v2244
    %v2255 = vunpack.c.l.b16 %v2245
    %v2256 = vunpack.c.l.b16 %v2246
    %v2257 = vunpack.c.l.b16 %v2247
    %v2258 = vpack.c.b16 %v2255, %v2254
    %v2259 = vpack.c.b16 %v2257, %v2256
    %v2263 = vsel %vm103, %v2248, 0
    %v2266 = vsel %vm103, %v2249, 0
    %2268 = vmatpush.bf16.msra.mxu0 0
    %2269 = vmatpush.bf16.msra.mxu0 0
    %2270 = vmatpush.bf16.msra.mxu0 0
    %2271 = vmatpush.bf16.msra.mxu0 0
    %2272 = vmatpush.bf16.msra.mxu0 0
    %2273 = vmatpush.bf16.msra.mxu0 0
    %2274 = vmatpush.bf16.msra.mxu0 %v2259
    %2275 = vmatpush.bf16.msra.mxu0 %v2258
    %2276 = vmatmul.bf16.gmra.mxu0 %v2263
    %v2277 = vpop.f32.mrf.mxu0
    %v2278 = vadd.f32 0.0, %v2277
    %v2279 = vpop.f32.mrf.mxu0
    %v2280 = vadd.f32 0.0, %v2279
    %2281 = vmatmul.bf16.gmra.mxu0 %v2266
    %v2282 = vpop.f32.mrf.mxu0
    %v2283 = vadd.f32 0.0, %v2282
    %v2284 = vpop.f32.mrf.mxu0
    %v2285 = vadd.f32 0.0, %v2284
    %2286 = vdwg.mxu0
    %v2287 = vmax.f32 %v2278, 0.0
    %v2288 = vmax.f32 %v2280, 0.0
    %v2289 = vmax.f32 %v2283, 0.0
    %v2290 = vmax.f32 %v2285, 0.0
    %v2291 = vadd.f32 %v2287, %v2239
    %v2292 = vadd.f32 %v2288, %v2240
    %v2293 = vadd.f32 %v2289, %v2241
    %v2294 = vadd.f32 %v2290, %v2242
    %s2295 = scalar_lea.vmem [#allocation6], 48
    %v2296 = vld [vmem:[%s2295] sm:$0xf]
    %v2297 = vld [vmem:[%s2295 + $0x4] sm:$0xf]
    %v2298 = vld [vmem:[%s2295 + $0x8] sm:$0xf]
    %v2299 = vld [vmem:[%s2295 + $0xc] sm:$0xf]
    %v2300 = vpack.c.bf16 %v2292, %v2291
    %v2301 = vpack.c.bf16 %v2294, %v2293
    %v2306 = vunpack.c.l.b16 %v2296
    %v2307 = vunpack.c.l.b16 %v2297
    %v2308 = vunpack.c.l.b16 %v2298
    %v2309 = vunpack.c.l.b16 %v2299
    %v2310 = vpack.c.b16 %v2307, %v2306
    %v2311 = vpack.c.b16 %v2309, %v2308
    %v2315 = vsel %vm103, %v2300, 0
    %v2318 = vsel %vm103, %v2301, 0
    %2320 = vmatpush.bf16.msra.mxu0 0
    %2321 = vmatpush.bf16.msra.mxu0 0
    %2322 = vmatpush.bf16.msra.mxu0 0
    %2323 = vmatpush.bf16.msra.mxu0 0
    %2324 = vmatpush.bf16.msra.mxu0 0
    %2325 = vmatpush.bf16.msra.mxu0 0
    %2326 = vmatpush.bf16.msra.mxu0 %v2311
    %2327 = vmatpush.bf16.msra.mxu0 %v2310
    %2328 = vmatmul.bf16.gmra.mxu0 %v2315
    %v2329 = vpop.f32.mrf.mxu0
    %v2330 = vadd.f32 0.0, %v2329
    %v2331 = vpop.f32.mrf.mxu0
    %v2332 = vadd.f32 0.0, %v2331
    %2333 = vmatmul.bf16.gmra.mxu0 %v2318
    %v2334 = vpop.f32.mrf.mxu0
    %v2335 = vadd.f32 0.0, %v2334
    %v2336 = vpop.f32.mrf.mxu0
    %v2337 = vadd.f32 0.0, %v2336
    %2338 = vdwg.mxu0
    %v2339 = vmax.f32 %v2330, 0.0
    %v2340 = vmax.f32 %v2332, 0.0
    %v2341 = vmax.f32 %v2335, 0.0
    %v2342 = vmax.f32 %v2337, 0.0
    %v2343 = vadd.f32 %v2339, %v2239
    %v2344 = vadd.f32 %v2340, %v2240
    %v2345 = vadd.f32 %v2341, %v2241
    %v2346 = vadd.f32 %v2342, %v2242
    %2347 = vst.msk [vmem:[%s8] sm:$0xff] %vm103, %v2343
    %2348 = vst.msk [vmem:[%s8 + $0x8] sm:$0xff] %vm103, %v2344
    %2349 = vst.msk [vmem:[%s8 + $0x10] sm:$0xff] %vm103, %v2345
    %2350 = vst.msk [vmem:[%s8 + $0x18] sm:$0xff] %vm103, %v2346
    // Predicated region
    $region46: #{transformer_block_forward.1} parent=1 // pred_check
      _
    $region47: #{transformer_block_forward.1} parent=1 // pred_check_branch
      %2352 = sbr.rel (0) target = $region49
    $region48: #{transformer_block_forward.1} parent=1 // pred_region
      _
    $region49: #{transformer_block_forward.1} parent=1 // pred_fallthru
      _
    // Predicated region
    $region50: #{transformer_block_forward.1} parent=1 // pred_check
      _
    $region51: #{transformer_block_forward.1} parent=1 // pred_check_branch
      %2354 = sbr.rel (0) target = $region53
    $region52: #{transformer_block_forward.1} parent=1 // pred_region
      _
    $region53: #{transformer_block_forward.1} parent=1 // pred_fallthru
      _
    %2355 = vsyncpa [#allocation3], 1
    %2356 = vsyncpa [#allocation5], 1

</llo_original>
